<compile_context>
chip_gen: v5e
topology: v5e:2x2
jax: 0.10.0
libtpu: 0.0.40
codegen_flags: <defaults>
</compile_context>

<pallas_src>
import functools
import math

import jax
import jax.numpy as jnp
from jax import lax
from jax.experimental import pallas as pl
from jax.experimental.pallas import tpu as pltpu


def _mha_kernel(xq_ref,    # (1, tq, C)   bf16  query-row tile of x
                xkv_ref,   # (1, N, C)    bf16  full rows of x (for K/V)
                wq_ref,    # (1, C, c_h)  bf16  this head's scaled Wq
                bq_ref,    # (1, 1, c_h)  f32
                wk_ref,    # (1, C, c_h)  bf16
                bk_ref,    # (1, 1, c_h)  f32
                wv_ref,    # (1, C, c_h)  bf16
                bv_ref,    # (1, 1, c_h)  f32
                wo_ref,    # (1, c_h, C)  bf16
                bo_ref,    # (1, C)       f32
                o_ref,     # (1, tq, C)   out dtype
                acc_ref,   # (tq, C)      f32   output-projection accumulator
                kc_ref,    # (head, N, c_h) bf16  per-batch K cache
                vc_ref,    # (head, N, c_h) bf16  per-batch V cache
                *, exp_dtype):
    qi = pl.program_id(1)
    hi = pl.program_id(2)
    cd = kc_ref.dtype                       # bf16 MXU operand dtype

    # --- K/V projection for this head: once per (batch, head), on the first
    # query tile; later query tiles reuse the cached copy. -------------------
    @pl.when(qi == 0)
    def _():
        xkv = xkv_ref[0]                                            # (N, C)
        k_h = jnp.dot(xkv, wk_ref[0],
                      preferred_element_type=jnp.float32) + bk_ref[0]
        v_h = jnp.dot(xkv, wv_ref[0],
                      preferred_element_type=jnp.float32) + bv_ref[0]
        kc_ref[hi] = k_h.astype(cd)
        vc_ref[hi] = v_h.astype(cd)

    # --- this head's attention for the current query tile -------------------
    xq = xq_ref[0]                                                  # (tq, C)
    # 1/sqrt(c_h) is already folded into wq/bq on the host.
    q_h = (jnp.dot(xq, wq_ref[0],
                   preferred_element_type=jnp.float32) + bq_ref[0]).astype(cd)
    k_h = kc_ref[hi]                                                # (N, c_h)
    v_h = vc_ref[hi]                                                # (N, c_h)

    # q @ k^T without an explicit transpose: contract last dim vs last dim.
    s = lax.dot_general(q_h, k_h, (((1,), (1,)), ((), ())),
                        preferred_element_type=jnp.float32)         # (tq, N)

    # Numerically-stable softmax, normalization deferred past the PV matmul.
    m = jnp.max(s, axis=-1, keepdims=True)                          # f32
    e = jnp.exp((s - m).astype(exp_dtype))                          # (tq, N)
    l = jnp.sum(e.astype(jnp.float32), axis=-1, keepdims=True)      # (tq, 1) f32
    pv = jnp.dot(e.astype(cd), v_h,
                 preferred_element_type=jnp.float32)                # (tq, c_h)
    att = pv * pl.reciprocal(l, approx=True)                        # (tq, c_h)

    # Output projection accumulated per head (no lane concat of heads).
    contrib = jnp.dot(att.astype(cd), wo_ref[0],
                      preferred_element_type=jnp.float32)           # (tq, C)

    @pl.when(hi == 0)
    def _():
        acc_ref[...] = jnp.zeros_like(acc_ref)

    acc_ref[...] += contrib

    @pl.when(hi == pl.num_programs(2) - 1)
    def _():
        o_ref[0] = (acc_ref[...] + bo_ref[...]).astype(o_ref.dtype)


def _build_mha_call(b, n, c, head, tq, out_dtype, *,
                    single_buffer_const, vmem_limit_bytes=None):
    c_h = c // head
    nq = n // tq

    def const_spec(shape, index_map):
        # Constant-ish blocks: request a single pipeline buffer (halves their
        # VMEM residency); fall back to the default when unsupported.
        if single_buffer_const:
            return pl.BlockSpec(shape, index_map, pipeline_mode=pl.Buffered(1))
        return pl.BlockSpec(shape, index_map)

    grid_spec = pltpu.PrefetchScalarGridSpec(
        num_scalar_prefetch=0,
        grid=(b, nq, head),
        in_specs=[
            pl.BlockSpec((1, tq, c), lambda bi, qi, hi: (bi, qi, 0)),   # x (Q rows)
            const_spec((1, n, c), lambda bi, qi, hi: (bi, 0, 0)),       # x (K/V rows)
            pl.BlockSpec((1, c, c_h), lambda bi, qi, hi: (hi, 0, 0)),   # Wq (scaled)
            pl.BlockSpec((1, 1, c_h), lambda bi, qi, hi: (hi, 0, 0)),   # bq (scaled)
            pl.BlockSpec((1, c, c_h), lambda bi, qi, hi: (hi, 0, 0)),   # Wk
            pl.BlockSpec((1, 1, c_h), lambda bi, qi, hi: (hi, 0, 0)),   # bk
            pl.BlockSpec((1, c, c_h), lambda bi, qi, hi: (hi, 0, 0)),   # Wv
            pl.BlockSpec((1, 1, c_h), lambda bi, qi, hi: (hi, 0, 0)),   # bv
            pl.BlockSpec((1, c_h, c), lambda bi, qi, hi: (hi, 0, 0)),   # Wo
            const_spec((1, c), lambda bi, qi, hi: (0, 0)),              # bo
        ],
        out_specs=pl.BlockSpec((1, tq, c), lambda bi, qi, hi: (bi, qi, 0)),
        scratch_shapes=[
            pltpu.VMEM((tq, c), jnp.float32),         # output-proj accumulator
            pltpu.VMEM((head, n, c_h), jnp.bfloat16), # K cache (per batch)
            pltpu.VMEM((head, n, c_h), jnp.bfloat16), # V cache (per batch)
        ],
    )

    cp_kwargs = dict(
        # batch: parallel (megacore / 2-TC sharding); query tiles: arbitrary
        # because the K/V cache written at q==0 is reused by later q tiles;
        # head: the accumulator (reduction) axis, innermost.
        dimension_semantics=("parallel", "arbitrary", "arbitrary"))
    if vmem_limit_bytes is not None:
        cp_kwargs["vmem_limit_bytes"] = vmem_limit_bytes

    kernel = functools.partial(_mha_kernel, exp_dtype=jnp.bfloat16)
    return pl.pallas_call(
        kernel,
        out_shape=jax.ShapeDtypeStruct((b, n, c), out_dtype),
        grid_spec=grid_spec,
        compiler_params=pltpu.CompilerParams(**cp_kwargs),
    )


def multi_headed_attention(x, params, head, *, q_tile=256, vmem_limit_bytes=None):
    """x: (B, N, C).  params: dict of (in,out) weights and (1,C) biases."""
    b, n, c = x.shape
    assert c % head == 0
    c_h = c // head
    tq = min(q_tile, n)
    assert n % tq == 0, "sequence length must be divisible by the query tile"
    scale = 1.0 / math.sqrt(c_h)
    cd = jnp.bfloat16

    # Host-side prep: fold the attention scale into Wq/bq, split weights per
    # head, and pre-cast all MXU operands to bf16 (biases stay f32).
    def per_head_w(w):                  # (C, C) in->out  ->  (head, C, c_h)
        return w.reshape(c, head, c_h).transpose(1, 0, 2).astype(cd)

    def per_head_b(bias):               # (1, C) -> (head, 1, c_h), f32
        return bias.reshape(head, c_h)[:, None, :].astype(jnp.float32)

    wq = per_head_w(params["wq"] * scale)
    bq = per_head_b(params["bq"] * scale)
    wk = per_head_w(params["wk"])
    bk = per_head_b(params["bk"])
    wv = per_head_w(params["wv"])
    bv = per_head_b(params["bv"])
    wo = params["wo"].reshape(head, c_h, c).astype(cd)
    bo = params["bo"].astype(jnp.float32)
    xc = x.astype(cd)

    args = (xc, xc, wq, bq, wk, bk, wv, bv, wo, bo)
    try:
        call = _build_mha_call(b, n, c, head, tq, x.dtype,
                               single_buffer_const=True,
                               vmem_limit_bytes=vmem_limit_bytes)
        return call(*args)
    except Exception:
        # pipeline_mode=pl.Buffered(1) not supported by this JAX/backend:
        # identical kernel, default (double) buffering for the const blocks.
        call = _build_mha_call(b, n, c, head, tq, x.dtype,
                               single_buffer_const=False,
                               vmem_limit_bytes=vmem_limit_bytes)
        return call(*args)


def _reference(x, params, head):
    """Pure-JAX f32 reference (eval-mode dropout = identity)."""
    b, n, c = x.shape
    c_h = c // head

    def lin(t, w, bias):
        return jnp.einsum("bnc,cd->bnd", t, w) + bias[0]

    q = lin(x, params["wq"], params["bq"]).reshape(b, n, head, c_h).transpose(0, 2, 1, 3)
    k = lin(x, params["wk"], params["bk"]).reshape(b, n, head, c_h).transpose(0, 2, 1, 3)
    v = lin(x, params["wv"], params["bv"]).reshape(b, n, head, c_h).transpose(0, 2, 1, 3)

    scores = jnp.einsum("bhqd,bhkd->bhqk", q, k) / math.sqrt(c_h)
    p = jax.nn.softmax(scores, axis=-1)
    att = jnp.einsum("bhqk,bhkd->bhqd", p, v)
    att = att.transpose(0, 2, 1, 3).reshape(b, n, c)
    return lin(att, params["wo"], params["bo"])


def _init_params(key, d_model):
    """Deterministic PyTorch-Linear-style init (uniform +-1/sqrt(fan_in))."""
    bound = 1.0 / math.sqrt(d_model)
    keys = jax.random.split(key, 8)
    mk_w = lambda k: jax.random.uniform(k, (d_model, d_model), jnp.float32,
                                        -bound, bound)
    mk_b = lambda k: jax.random.uniform(k, (1, d_model), jnp.float32,
                                        -bound, bound)
    return {
        "wq": mk_w(keys[0]), "bq": mk_b(keys[1]),
        "wk": mk_w(keys[2]), "bk": mk_b(keys[3]),
        "wv": mk_w(keys[4]), "bv": mk_b(keys[5]),
        "wo": mk_w(keys[6]), "bo": mk_b(keys[7]),
    }


if __name__ == "__main__":
    # bf16 MXU operands + bf16 exp + approximate reciprocal -> compare against
    # the f32 reference with a loosened tolerance.
    ATOL = RTOL = 3e-2

    # Config 1: the module's toy shapes (single query tile).
    B, N, C, HEAD = 2, 8, 32, 4
    k_x, k_p = jax.random.split(jax.random.PRNGKey(0))
    x = jax.random.normal(k_x, (B, N, C), jnp.float32)
    params = _init_params(k_p, C)

    out = jax.block_until_ready(multi_headed_attention(x, params, HEAD))
    ref = _reference(x, params, HEAD)
    assert out.shape == (B, N, C)
    assert jnp.allclose(out, ref, atol=ATOL, rtol=RTOL), \
        f"max abs err {jnp.max(jnp.abs(out - ref))}"

    # Config 2: multiple query tiles -> exercises the head-reduction
    # accumulator across q-tiles and the cached K/V reuse for q > 0.
    B2, N2, C2, HEAD2 = 2, 32, 32, 4
    k_x2, k_p2 = jax.random.split(jax.random.PRNGKey(1))
    x2 = jax.random.normal(k_x2, (B2, N2, C2), jnp.float32)
    params2 = _init_params(k_p2, C2)

    out2 = jax.block_until_ready(
        multi_headed_attention(x2, params2, HEAD2, q_tile=8))
    ref2 = _reference(x2, params2, HEAD2)
    assert out2.shape == (B2, N2, C2)
    assert jnp.allclose(out2, ref2, atol=ATOL, rtol=RTOL), \
        f"max abs err {jnp.max(jnp.abs(out2 - ref2))}"

    print("KERNEL_OK")
</pallas_src>

<mosaic_0001>
module attributes {stable_mosaic.version = 11 : i64} {
  func.func @_mha_kernel(%arg0: i32, %arg1: i32, %arg2: i32, %arg3: memref<1x8x32xbf16, #tpu.memory_space<vmem>>, %arg4: memref<1x8x32xbf16, #tpu.memory_space<vmem>>, %arg5: memref<1x32x8xbf16, #tpu.memory_space<vmem>>, %arg6: memref<1x1x8xf32, #tpu.memory_space<vmem>>, %arg7: memref<1x32x8xbf16, #tpu.memory_space<vmem>>, %arg8: memref<1x1x8xf32, #tpu.memory_space<vmem>>, %arg9: memref<1x32x8xbf16, #tpu.memory_space<vmem>>, %arg10: memref<1x1x8xf32, #tpu.memory_space<vmem>>, %arg11: memref<1x8x32xbf16, #tpu.memory_space<vmem>>, %arg12: memref<1x32xf32, #tpu.memory_space<vmem>>, %arg13: memref<1x8x32xf32, #tpu.memory_space<vmem>>, %arg14: memref<8x32xf32, #tpu.memory_space<vmem>>, %arg15: memref<4x8x8xbf16, #tpu.memory_space<vmem>>, %arg16: memref<4x8x8xbf16, #tpu.memory_space<vmem>>) attributes {dimension_semantics = [#tpu.dimension_semantics<parallel>, #tpu.dimension_semantics<arbitrary>, #tpu.dimension_semantics<arbitrary>], iteration_bounds = array<i64: 2, 1, 4>, scalar_prefetch = 0 : i64, scratch_operands = 3 : i64, tpu.core_type = #tpu.core_type<tc>, window_params = [{transform_indices = @transform_0, window_bounds = array<i64: 1, 8, 32>}, {pipeline_mode = #tpu.pipeline_mode<synchronous>, transform_indices = @transform_1, window_bounds = array<i64: 1, 8, 32>}, {transform_indices = @transform_2, window_bounds = array<i64: 1, 32, 8>}, {transform_indices = @transform_3, window_bounds = array<i64: 1, 1, 8>}, {transform_indices = @transform_4, window_bounds = array<i64: 1, 32, 8>}, {transform_indices = @transform_5, window_bounds = array<i64: 1, 1, 8>}, {transform_indices = @transform_6, window_bounds = array<i64: 1, 32, 8>}, {transform_indices = @transform_7, window_bounds = array<i64: 1, 1, 8>}, {transform_indices = @transform_8, window_bounds = array<i64: 1, 8, 32>}, {pipeline_mode = #tpu.pipeline_mode<synchronous>, transform_indices = @transform_9, window_bounds = array<i64: 1, 32>}, {transform_indices = @transform_10, window_bounds = array<i64: 1, 8, 32>}]} {
    %c0_i32 = arith.constant 0 : i32
    %0 = arith.cmpi eq, %arg1, %c0_i32 : i32
    %1 = arith.extui %0 : i1 to i32
    %c0_i32_0 = arith.constant 0 : i32
    %2 = arith.cmpi ne, %1, %c0_i32_0 : i32
    scf.if %2 {
      %c0_28 = arith.constant 0 : index
      %c0_29 = arith.constant 0 : index
      %c0_30 = arith.constant 0 : index
      %46 = vector.load %arg4[%c0_28, %c0_29, %c0_30] : memref<1x8x32xbf16, #tpu.memory_space<vmem>>, vector<1x8x32xbf16>
      %47 = vector.shape_cast %46 : vector<1x8x32xbf16> to vector<8x32xbf16>
      %c0_31 = arith.constant 0 : index
      %c0_32 = arith.constant 0 : index
      %c0_33 = arith.constant 0 : index
      %48 = vector.load %arg7[%c0_31, %c0_32, %c0_33] : memref<1x32x8xbf16, #tpu.memory_space<vmem>>, vector<1x32x8xbf16>
      %49 = vector.shape_cast %48 : vector<1x32x8xbf16> to vector<32x8xbf16>
      %cst_34 = arith.constant dense<0.000000e+00> : vector<8x8xf32>
      %50 = tpu.matmul %47, %49, %cst_34 {dimension_numbers = #tpu.dot_dimension_numbers<[1], [0], [0], [1], [0, 0, 1, 1], [], []>} : vector<8x32xbf16>, vector<32x8xbf16>, vector<8x8xf32> -> vector<8x8xf32>
      %c0_35 = arith.constant 0 : index
      %c0_36 = arith.constant 0 : index
      %c0_37 = arith.constant 0 : index
      %51 = vector.load %arg8[%c0_35, %c0_36, %c0_37] : memref<1x1x8xf32, #tpu.memory_space<vmem>>, vector<1x1x8xf32>
      %52 = vector.shape_cast %51 : vector<1x1x8xf32> to vector<1x8xf32>
      %53 = vector.broadcast %52 : vector<1x8xf32> to vector<8x8xf32>
      %54 = arith.addf %50, %53 : vector<8x8xf32>
      %c0_38 = arith.constant 0 : index
      %c0_39 = arith.constant 0 : index
      %c0_40 = arith.constant 0 : index
      %55 = vector.load %arg9[%c0_38, %c0_39, %c0_40] : memref<1x32x8xbf16, #tpu.memory_space<vmem>>, vector<1x32x8xbf16>
      %56 = vector.shape_cast %55 : vector<1x32x8xbf16> to vector<32x8xbf16>
      %cst_41 = arith.constant dense<0.000000e+00> : vector<8x8xf32>
      %57 = tpu.matmul %47, %56, %cst_41 {dimension_numbers = #tpu.dot_dimension_numbers<[1], [0], [0], [1], [0, 0, 1, 1], [], []>} : vector<8x32xbf16>, vector<32x8xbf16>, vector<8x8xf32> -> vector<8x8xf32>
      %c0_42 = arith.constant 0 : index
      %c0_43 = arith.constant 0 : index
      %c0_44 = arith.constant 0 : index
      %58 = vector.load %arg10[%c0_42, %c0_43, %c0_44] : memref<1x1x8xf32, #tpu.memory_space<vmem>>, vector<1x1x8xf32>
      %59 = vector.shape_cast %58 : vector<1x1x8xf32> to vector<1x8xf32>
      %60 = vector.broadcast %59 : vector<1x8xf32> to vector<8x8xf32>
      %61 = arith.addf %57, %60 : vector<8x8xf32>
      %62 = arith.truncf %54 : vector<8x8xf32> to vector<8x8xbf16>
      %63 = arith.index_cast %arg2 : i32 to index
      %c0_45 = arith.constant 0 : index
      %c0_46 = arith.constant 0 : index
      %64 = vector.load %arg15[%63, %c0_45, %c0_46] : memref<4x8x8xbf16, #tpu.memory_space<vmem>>, vector<1x8x8xbf16>
      %65 = vector.shape_cast %64 : vector<1x8x8xbf16> to vector<8x8xbf16>
      %66 = vector.shape_cast %62 : vector<8x8xbf16> to vector<1x8x8xbf16>
      tpu.vector_store %arg15[%63, %c0_45, %c0_46], %66 {strides = array<i32>} : memref<4x8x8xbf16, #tpu.memory_space<vmem>>, vector<1x8x8xbf16>,
      %67 = arith.truncf %61 : vector<8x8xf32> to vector<8x8xbf16>
      %68 = arith.index_cast %arg2 : i32 to index
      %c0_47 = arith.constant 0 : index
      %c0_48 = arith.constant 0 : index
      %69 = vector.load %arg16[%68, %c0_47, %c0_48] : memref<4x8x8xbf16, #tpu.memory_space<vmem>>, vector<1x8x8xbf16>
      %70 = vector.shape_cast %69 : vector<1x8x8xbf16> to vector<8x8xbf16>
      %71 = vector.shape_cast %67 : vector<8x8xbf16> to vector<1x8x8xbf16>
      tpu.vector_store %arg16[%68, %c0_47, %c0_48], %71 {strides = array<i32>} : memref<4x8x8xbf16, #tpu.memory_space<vmem>>, vector<1x8x8xbf16>,
    } else {
    }
    %c0 = arith.constant 0 : index
    %c0_1 = arith.constant 0 : index
    %c0_2 = arith.constant 0 : index
    %3 = vector.load %arg3[%c0, %c0_1, %c0_2] : memref<1x8x32xbf16, #tpu.memory_space<vmem>>, vector<1x8x32xbf16>
    %4 = vector.shape_cast %3 : vector<1x8x32xbf16> to vector<8x32xbf16>
    %c0_3 = arith.constant 0 : index
    %c0_4 = arith.constant 0 : index
    %c0_5 = arith.constant 0 : index
    %5 = vector.load %arg5[%c0_3, %c0_4, %c0_5] : memref<1x32x8xbf16, #tpu.memory_space<vmem>>, vector<1x32x8xbf16>
    %6 = vector.shape_cast %5 : vector<1x32x8xbf16> to vector<32x8xbf16>
    %cst = arith.constant dense<0.000000e+00> : vector<8x8xf32>
    %7 = tpu.matmul %4, %6, %cst {dimension_numbers = #tpu.dot_dimension_numbers<[1], [0], [0], [1], [0, 0, 1, 1], [], []>} : vector<8x32xbf16>, vector<32x8xbf16>, vector<8x8xf32> -> vector<8x8xf32>
    %c0_6 = arith.constant 0 : index
    %c0_7 = arith.constant 0 : index
    %c0_8 = arith.constant 0 : index
    %8 = vector.load %arg6[%c0_6, %c0_7, %c0_8] : memref<1x1x8xf32, #tpu.memory_space<vmem>>, vector<1x1x8xf32>
    %9 = vector.shape_cast %8 : vector<1x1x8xf32> to vector<1x8xf32>
    %10 = vector.broadcast %9 : vector<1x8xf32> to vector<8x8xf32>
    %11 = arith.addf %7, %10 : vector<8x8xf32>
    %12 = arith.truncf %11 : vector<8x8xf32> to vector<8x8xbf16>
    %13 = arith.index_cast %arg2 : i32 to index
    %c0_9 = arith.constant 0 : index
    %c0_10 = arith.constant 0 : index
    %14 = vector.load %arg15[%13, %c0_9, %c0_10] : memref<4x8x8xbf16, #tpu.memory_space<vmem>>, vector<1x8x8xbf16>
    %15 = vector.shape_cast %14 : vector<1x8x8xbf16> to vector<8x8xbf16>
    %16 = arith.index_cast %arg2 : i32 to index
    %c0_11 = arith.constant 0 : index
    %c0_12 = arith.constant 0 : index
    %17 = vector.load %arg16[%16, %c0_11, %c0_12] : memref<4x8x8xbf16, #tpu.memory_space<vmem>>, vector<1x8x8xbf16>
    %18 = vector.shape_cast %17 : vector<1x8x8xbf16> to vector<8x8xbf16>
    %cst_13 = arith.constant dense<0.000000e+00> : vector<8x8xf32>
    %19 = tpu.matmul %12, %15, %cst_13 {dimension_numbers = #tpu.dot_dimension_numbers<[1], [1], [0], [0], [0, 0, 1, 0], [], []>} : vector<8x8xbf16>, vector<8x8xbf16>, vector<8x8xf32> -> vector<8x8xf32>
    %cst_14 = arith.constant dense<0xFF800000> : vector<8xf32>
    %20 = vector.multi_reduction <maximumf>, %19, %cst_14 [1] : vector<8x8xf32> to vector<8xf32>
    %21 = vector.shape_cast %20 : vector<8xf32> to vector<8x1xf32>
    %22 = vector.broadcast %21 : vector<8x1xf32> to vector<8x8xf32>
    %23 = arith.subf %19, %22 : vector<8x8xf32>
    %24 = arith.truncf %23 : vector<8x8xf32> to vector<8x8xbf16>
    %25 = math.exp %24 : vector<8x8xbf16>
    %26 = arith.extf %25 : vector<8x8xbf16> to vector<8x8xf32>
    %cst_15 = arith.constant dense<0.000000e+00> : vector<8xf32>
    %27 = vector.multi_reduction <add>, %26, %cst_15 [1] : vector<8x8xf32> to vector<8xf32>
    %28 = vector.shape_cast %27 : vector<8xf32> to vector<8x1xf32>
    %cst_16 = arith.constant dense<0.000000e+00> : vector<8x8xf32>
    %29 = tpu.matmul %25, %18, %cst_16 {dimension_numbers = #tpu.dot_dimension_numbers<[1], [0], [0], [1], [0, 0, 1, 1], [], []>} : vector<8x8xbf16>, vector<8x8xbf16>, vector<8x8xf32> -> vector<8x8xf32>
    %30 = tpu.reciprocal %28 {approx = true} : vector<8x1xf32> -> vector<8x1xf32>
    %31 = vector.broadcast %30 : vector<8x1xf32> to vector<8x8xf32>
    %32 = arith.mulf %29, %31 : vector<8x8xf32>
    %33 = arith.truncf %32 : vector<8x8xf32> to vector<8x8xbf16>
    %c0_17 = arith.constant 0 : index
    %c0_18 = arith.constant 0 : index
    %c0_19 = arith.constant 0 : index
    %34 = vector.load %arg11[%c0_17, %c0_18, %c0_19] : memref<1x8x32xbf16, #tpu.memory_space<vmem>>, vector<1x8x32xbf16>
    %35 = vector.shape_cast %34 : vector<1x8x32xbf16> to vector<8x32xbf16>
    %cst_20 = arith.constant dense<0.000000e+00> : vector<8x32xf32>
    %36 = tpu.matmul %33, %35, %cst_20 {dimension_numbers = #tpu.dot_dimension_numbers<[1], [0], [0], [1], [0, 0, 1, 1], [], []>} : vector<8x8xbf16>, vector<8x32xbf16>, vector<8x32xf32> -> vector<8x32xf32>
    %c0_i32_21 = arith.constant 0 : i32
    %37 = arith.cmpi eq, %arg2, %c0_i32_21 : i32
    %38 = arith.extui %37 : i1 to i32
    %c0_i32_22 = arith.constant 0 : i32
    %39 = arith.cmpi ne, %38, %c0_i32_22 : i32
    scf.if %39 {
      %cst_28 = arith.constant 0.000000e+00 : f32
      %46 = vector.broadcast %cst_28 : f32 to vector<8x32xf32>
      %c0_29 = arith.constant 0 : index
      %c0_30 = arith.constant 0 : index
      %47 = vector.load %arg14[%c0_29, %c0_30] : memref<8x32xf32, #tpu.memory_space<vmem>>, vector<8x32xf32>
      tpu.vector_store %arg14[%c0_29, %c0_30], %46 {strides = array<i32>} : memref<8x32xf32, #tpu.memory_space<vmem>>, vector<8x32xf32>,
    } else {
    }
    %c0_23 = arith.constant 0 : index
    %c0_24 = arith.constant 0 : index
    %40 = vector.load %arg14[%c0_23, %c0_24] : memref<8x32xf32, #tpu.memory_space<vmem>>, vector<8x32xf32>
    %41 = arith.addf %40, %36 : vector<8x32xf32>
    %c0_25 = arith.constant 0 : index
    %c0_26 = arith.constant 0 : index
    %42 = vector.load %arg14[%c0_25, %c0_26] : memref<8x32xf32, #tpu.memory_space<vmem>>, vector<8x32xf32>
    tpu.vector_store %arg14[%c0_25, %c0_26], %41 {strides = array<i32>} : memref<8x32xf32, #tpu.memory_space<vmem>>, vector<8x32xf32>,
    %c3_i32 = arith.constant 3 : i32
    %43 = arith.cmpi eq, %arg2, %c3_i32 : i32
    %44 = arith.extui %43 : i1 to i32
    %c0_i32_27 = arith.constant 0 : i32
    %45 = arith.cmpi ne, %44, %c0_i32_27 : i32
    scf.if %45 {
      %c0_28 = arith.constant 0 : index
      %c0_29 = arith.constant 0 : index
      %46 = vector.load %arg14[%c0_28, %c0_29] : memref<8x32xf32, #tpu.memory_space<vmem>>, vector<8x32xf32>
      %c0_30 = arith.constant 0 : index
      %c0_31 = arith.constant 0 : index
      %47 = vector.load %arg12[%c0_30, %c0_31] : memref<1x32xf32, #tpu.memory_space<vmem>>, vector<1x32xf32>
      %48 = vector.broadcast %47 : vector<1x32xf32> to vector<8x32xf32>
      %49 = arith.addf %46, %48 : vector<8x32xf32>
      %c0_32 = arith.constant 0 : index
      %c0_33 = arith.constant 0 : index
      %c0_34 = arith.constant 0 : index
      %50 = vector.load %arg13[%c0_32, %c0_33, %c0_34] : memref<1x8x32xf32, #tpu.memory_space<vmem>>, vector<1x8x32xf32>
      %51 = vector.shape_cast %50 : vector<1x8x32xf32> to vector<8x32xf32>
      %52 = vector.shape_cast %49 : vector<8x32xf32> to vector<1x8x32xf32>
      tpu.vector_store %arg13[%c0_32, %c0_33, %c0_34], %52 {strides = array<i32>} : memref<1x8x32xf32, #tpu.memory_space<vmem>>, vector<1x8x32xf32>,
    } else {
    }
    return
  }
  func.func @transform_0(%arg0: i32, %arg1: i32, %arg2: i32) -> (i32, i32, i32) {
    %c0_i32 = arith.constant 0 : i32
    %c0_i32_0 = arith.constant 0 : i32
    return %arg0, %arg1, %c0_i32 : i32, i32, i32
  }
  func.func @transform_1(%arg0: i32, %arg1: i32, %arg2: i32) -> (i32, i32, i32) {
    %c0_i32 = arith.constant 0 : i32
    %c0_i32_0 = arith.constant 0 : i32
    %c0_i32_1 = arith.constant 0 : i32
    return %arg0, %c0_i32, %c0_i32_0 : i32, i32, i32
  }
  func.func @transform_2(%arg0: i32, %arg1: i32, %arg2: i32) -> (i32, i32, i32) {
    %c0_i32 = arith.constant 0 : i32
    %c0_i32_0 = arith.constant 0 : i32
    %c0_i32_1 = arith.constant 0 : i32
    return %arg2, %c0_i32, %c0_i32_0 : i32, i32, i32
  }
  func.func @transform_3(%arg0: i32, %arg1: i32, %arg2: i32) -> (i32, i32, i32) {
    %c0_i32 = arith.constant 0 : i32
    %c0_i32_0 = arith.constant 0 : i32
    %c0_i32_1 = arith.constant 0 : i32
    return %arg2, %c0_i32, %c0_i32_0 : i32, i32, i32
  }
  func.func @transform_4(%arg0: i32, %arg1: i32, %arg2: i32) -> (i32, i32, i32) {
    %c0_i32 = arith.constant 0 : i32
    %c0_i32_0 = arith.constant 0 : i32
    %c0_i32_1 = arith.constant 0 : i32
    return %arg2, %c0_i32, %c0_i32_0 : i32, i32, i32
  }
  func.func @transform_5(%arg0: i32, %arg1: i32, %arg2: i32) -> (i32, i32, i32) {
    %c0_i32 = arith.constant 0 : i32
    %c0_i32_0 = arith.constant 0 : i32
    %c0_i32_1 = arith.constant 0 : i32
    return %arg2, %c0_i32, %c0_i32_0 : i32, i32, i32
  }
  func.func @transform_6(%arg0: i32, %arg1: i32, %arg2: i32) -> (i32, i32, i32) {
    %c0_i32 = arith.constant 0 : i32
    %c0_i32_0 = arith.constant 0 : i32
    %c0_i32_1 = arith.constant 0 : i32
    return %arg2, %c0_i32, %c0_i32_0 : i32, i32, i32
  }
  func.func @transform_7(%arg0: i32, %arg1: i32, %arg2: i32) -> (i32, i32, i32) {
    %c0_i32 = arith.constant 0 : i32
    %c0_i32_0 = arith.constant 0 : i32
    %c0_i32_1 = arith.constant 0 : i32
    return %arg2, %c0_i32, %c0_i32_0 : i32, i32, i32
  }
  func.func @transform_8(%arg0: i32, %arg1: i32, %arg2: i32) -> (i32, i32, i32) {
    %c0_i32 = arith.constant 0 : i32
    %c0_i32_0 = arith.constant 0 : i32
    %c0_i32_1 = arith.constant 0 : i32
    return %arg2, %c0_i32, %c0_i32_0 : i32, i32, i32
  }
  func.func @transform_9(%arg0: i32, %arg1: i32, %arg2: i32) -> (i32, i32) {
    %c0_i32 = arith.constant 0 : i32
    %c0_i32_0 = arith.constant 0 : i32
    %c0_i32_1 = arith.constant 0 : i32
    return %c0_i32, %c0_i32_0 : i32, i32
  }
  func.func @transform_10(%arg0: i32, %arg1: i32, %arg2: i32) -> (i32, i32, i32) {
    %c0_i32 = arith.constant 0 : i32
    %c0_i32_0 = arith.constant 0 : i32
    return %arg0, %arg1, %c0_i32 : i32, i32, i32
  }
}

module attributes {stable_mosaic.version = 11 : i64} {
  func.func @_mha_kernel(%arg0: i32, %arg1: i32, %arg2: i32, %arg3: memref<1x8x32xbf16, #tpu.memory_space<vmem>>, %arg4: memref<1x8x32xbf16, #tpu.memory_space<vmem>>, %arg5: memref<1x32x8xbf16, #tpu.memory_space<vmem>>, %arg6: memref<1x1x8xf32, #tpu.memory_space<vmem>>, %arg7: memref<1x32x8xbf16, #tpu.memory_space<vmem>>, %arg8: memref<1x1x8xf32, #tpu.memory_space<vmem>>, %arg9: memref<1x32x8xbf16, #tpu.memory_space<vmem>>, %arg10: memref<1x1x8xf32, #tpu.memory_space<vmem>>, %arg11: memref<1x8x32xbf16, #tpu.memory_space<vmem>>, %arg12: memref<1x32xf32, #tpu.memory_space<vmem>>, %arg13: memref<1x8x32xf32, #tpu.memory_space<vmem>>, %arg14: memref<8x32xf32, #tpu.memory_space<vmem>>, %arg15: memref<4x8x8xbf16, #tpu.memory_space<vmem>>, %arg16: memref<4x8x8xbf16, #tpu.memory_space<vmem>>) attributes {dimension_semantics = [#tpu.dimension_semantics<parallel>, #tpu.dimension_semantics<arbitrary>, #tpu.dimension_semantics<arbitrary>], iteration_bounds = array<i64: 2, 1, 4>, scalar_prefetch = 0 : i64, scratch_operands = 3 : i64, tpu.core_type = #tpu.core_type<tc>, window_params = [{transform_indices = @transform_0, window_bounds = array<i64: 1, 8, 32>}, {transform_indices = @transform_1, window_bounds = array<i64: 1, 8, 32>}, {transform_indices = @transform_2, window_bounds = array<i64: 1, 32, 8>}, {transform_indices = @transform_3, window_bounds = array<i64: 1, 1, 8>}, {transform_indices = @transform_4, window_bounds = array<i64: 1, 32, 8>}, {transform_indices = @transform_5, window_bounds = array<i64: 1, 1, 8>}, {transform_indices = @transform_6, window_bounds = array<i64: 1, 32, 8>}, {transform_indices = @transform_7, window_bounds = array<i64: 1, 1, 8>}, {transform_indices = @transform_8, window_bounds = array<i64: 1, 8, 32>}, {pipeline_mode = #tpu.pipeline_mode<synchronous>, transform_indices = @transform_9, window_bounds = array<i64: 1, 32>}, {transform_indices = @transform_10, window_bounds = array<i64: 1, 8, 32>}]} {
    %c0_i32 = arith.constant 0 : i32
    %0 = arith.cmpi eq, %arg1, %c0_i32 : i32
    %1 = arith.extui %0 : i1 to i32
    %c0_i32_0 = arith.constant 0 : i32
    %2 = arith.cmpi ne, %1, %c0_i32_0 : i32
    scf.if %2 {
      %c0_28 = arith.constant 0 : index
      %c0_29 = arith.constant 0 : index
      %c0_30 = arith.constant 0 : index
      %46 = vector.load %arg4[%c0_28, %c0_29, %c0_30] : memref<1x8x32xbf16, #tpu.memory_space<vmem>>, vector<1x8x32xbf16>
      %47 = vector.shape_cast %46 : vector<1x8x32xbf16> to vector<8x32xbf16>
      %c0_31 = arith.constant 0 : index
      %c0_32 = arith.constant 0 : index
      %c0_33 = arith.constant 0 : index
      %48 = vector.load %arg7[%c0_31, %c0_32, %c0_33] : memref<1x32x8xbf16, #tpu.memory_space<vmem>>, vector<1x32x8xbf16>
      %49 = vector.shape_cast %48 : vector<1x32x8xbf16> to vector<32x8xbf16>
      %cst_34 = arith.constant dense<0.000000e+00> : vector<8x8xf32>
      %50 = tpu.matmul %47, %49, %cst_34 {dimension_numbers = #tpu.dot_dimension_numbers<[1], [0], [0], [1], [0, 0, 1, 1], [], []>} : vector<8x32xbf16>, vector<32x8xbf16>, vector<8x8xf32> -> vector<8x8xf32>
      %c0_35 = arith.constant 0 : index
      %c0_36 = arith.constant 0 : index
      %c0_37 = arith.constant 0 : index
      %51 = vector.load %arg8[%c0_35, %c0_36, %c0_37] : memref<1x1x8xf32, #tpu.memory_space<vmem>>, vector<1x1x8xf32>
      %52 = vector.shape_cast %51 : vector<1x1x8xf32> to vector<1x8xf32>
      %53 = vector.broadcast %52 : vector<1x8xf32> to vector<8x8xf32>
      %54 = arith.addf %50, %53 : vector<8x8xf32>
      %c0_38 = arith.constant 0 : index
      %c0_39 = arith.constant 0 : index
      %c0_40 = arith.constant 0 : index
      %55 = vector.load %arg9[%c0_38, %c0_39, %c0_40] : memref<1x32x8xbf16, #tpu.memory_space<vmem>>, vector<1x32x8xbf16>
      %56 = vector.shape_cast %55 : vector<1x32x8xbf16> to vector<32x8xbf16>
      %cst_41 = arith.constant dense<0.000000e+00> : vector<8x8xf32>
      %57 = tpu.matmul %47, %56, %cst_41 {dimension_numbers = #tpu.dot_dimension_numbers<[1], [0], [0], [1], [0, 0, 1, 1], [], []>} : vector<8x32xbf16>, vector<32x8xbf16>, vector<8x8xf32> -> vector<8x8xf32>
      %c0_42 = arith.constant 0 : index
      %c0_43 = arith.constant 0 : index
      %c0_44 = arith.constant 0 : index
      %58 = vector.load %arg10[%c0_42, %c0_43, %c0_44] : memref<1x1x8xf32, #tpu.memory_space<vmem>>, vector<1x1x8xf32>
      %59 = vector.shape_cast %58 : vector<1x1x8xf32> to vector<1x8xf32>
      %60 = vector.broadcast %59 : vector<1x8xf32> to vector<8x8xf32>
      %61 = arith.addf %57, %60 : vector<8x8xf32>
      %62 = arith.truncf %54 : vector<8x8xf32> to vector<8x8xbf16>
      %63 = arith.index_cast %arg2 : i32 to index
      %c0_45 = arith.constant 0 : index
      %c0_46 = arith.constant 0 : index
      %64 = vector.load %arg15[%63, %c0_45, %c0_46] : memref<4x8x8xbf16, #tpu.memory_space<vmem>>, vector<1x8x8xbf16>
      %65 = vector.shape_cast %64 : vector<1x8x8xbf16> to vector<8x8xbf16>
      %66 = vector.shape_cast %62 : vector<8x8xbf16> to vector<1x8x8xbf16>
      tpu.vector_store %arg15[%63, %c0_45, %c0_46], %66 {strides = array<i32>} : memref<4x8x8xbf16, #tpu.memory_space<vmem>>, vector<1x8x8xbf16>,
      %67 = arith.truncf %61 : vector<8x8xf32> to vector<8x8xbf16>
      %68 = arith.index_cast %arg2 : i32 to index
      %c0_47 = arith.constant 0 : index
      %c0_48 = arith.constant 0 : index
      %69 = vector.load %arg16[%68, %c0_47, %c0_48] : memref<4x8x8xbf16, #tpu.memory_space<vmem>>, vector<1x8x8xbf16>
      %70 = vector.shape_cast %69 : vector<1x8x8xbf16> to vector<8x8xbf16>
      %71 = vector.shape_cast %67 : vector<8x8xbf16> to vector<1x8x8xbf16>
      tpu.vector_store %arg16[%68, %c0_47, %c0_48], %71 {strides = array<i32>} : memref<4x8x8xbf16, #tpu.memory_space<vmem>>, vector<1x8x8xbf16>,
    } else {
    }
    %c0 = arith.constant 0 : index
    %c0_1 = arith.constant 0 : index
    %c0_2 = arith.constant 0 : index
    %3 = vector.load %arg3[%c0, %c0_1, %c0_2] : memref<1x8x32xbf16, #tpu.memory_space<vmem>>, vector<1x8x32xbf16>
    %4 = vector.shape_cast %3 : vector<1x8x32xbf16> to vector<8x32xbf16>
    %c0_3 = arith.constant 0 : index
    %c0_4 = arith.constant 0 : index
    %c0_5 = arith.constant 0 : index
    %5 = vector.load %arg5[%c0_3, %c0_4, %c0_5] : memref<1x32x8xbf16, #tpu.memory_space<vmem>>, vector<1x32x8xbf16>
    %6 = vector.shape_cast %5 : vector<1x32x8xbf16> to vector<32x8xbf16>
    %cst = arith.constant dense<0.000000e+00> : vector<8x8xf32>
    %7 = tpu.matmul %4, %6, %cst {dimension_numbers = #tpu.dot_dimension_numbers<[1], [0], [0], [1], [0, 0, 1, 1], [], []>} : vector<8x32xbf16>, vector<32x8xbf16>, vector<8x8xf32> -> vector<8x8xf32>
    %c0_6 = arith.constant 0 : index
    %c0_7 = arith.constant 0 : index
    %c0_8 = arith.constant 0 : index
    %8 = vector.load %arg6[%c0_6, %c0_7, %c0_8] : memref<1x1x8xf32, #tpu.memory_space<vmem>>, vector<1x1x8xf32>
    %9 = vector.shape_cast %8 : vector<1x1x8xf32> to vector<1x8xf32>
    %10 = vector.broadcast %9 : vector<1x8xf32> to vector<8x8xf32>
    %11 = arith.addf %7, %10 : vector<8x8xf32>
    %12 = arith.truncf %11 : vector<8x8xf32> to vector<8x8xbf16>
    %13 = arith.index_cast %arg2 : i32 to index
    %c0_9 = arith.constant 0 : index
    %c0_10 = arith.constant 0 : index
    %14 = vector.load %arg15[%13, %c0_9, %c0_10] : memref<4x8x8xbf16, #tpu.memory_space<vmem>>, vector<1x8x8xbf16>
    %15 = vector.shape_cast %14 : vector<1x8x8xbf16> to vector<8x8xbf16>
    %16 = arith.index_cast %arg2 : i32 to index
    %c0_11 = arith.constant 0 : index
    %c0_12 = arith.constant 0 : index
    %17 = vector.load %arg16[%16, %c0_11, %c0_12] : memref<4x8x8xbf16, #tpu.memory_space<vmem>>, vector<1x8x8xbf16>
    %18 = vector.shape_cast %17 : vector<1x8x8xbf16> to vector<8x8xbf16>
    %cst_13 = arith.constant dense<0.000000e+00> : vector<8x8xf32>
    %19 = tpu.matmul %12, %15, %cst_13 {dimension_numbers = #tpu.dot_dimension_numbers<[1], [1], [0], [0], [0, 0, 1, 0], [], []>} : vector<8x8xbf16>, vector<8x8xbf16>, vector<8x8xf32> -> vector<8x8xf32>
    %cst_14 = arith.constant dense<0xFF800000> : vector<8xf32>
    %20 = vector.multi_reduction <maximumf>, %19, %cst_14 [1] : vector<8x8xf32> to vector<8xf32>
    %21 = vector.shape_cast %20 : vector<8xf32> to vector<8x1xf32>
    %22 = vector.broadcast %21 : vector<8x1xf32> to vector<8x8xf32>
    %23 = arith.subf %19, %22 : vector<8x8xf32>
    %24 = arith.truncf %23 : vector<8x8xf32> to vector<8x8xbf16>
    %25 = math.exp %24 : vector<8x8xbf16>
    %26 = arith.extf %25 : vector<8x8xbf16> to vector<8x8xf32>
    %cst_15 = arith.constant dense<0.000000e+00> : vector<8xf32>
    %27 = vector.multi_reduction <add>, %26, %cst_15 [1] : vector<8x8xf32> to vector<8xf32>
    %28 = vector.shape_cast %27 : vector<8xf32> to vector<8x1xf32>
    %cst_16 = arith.constant dense<0.000000e+00> : vector<8x8xf32>
    %29 = tpu.matmul %25, %18, %cst_16 {dimension_numbers = #tpu.dot_dimension_numbers<[1], [0], [0], [1], [0, 0, 1, 1], [], []>} : vector<8x8xbf16>, vector<8x8xbf16>, vector<8x8xf32> -> vector<8x8xf32>
    %30 = tpu.reciprocal %28 {approx = true} : vector<8x1xf32> -> vector<8x1xf32>
    %31 = vector.broadcast %30 : vector<8x1xf32> to vector<8x8xf32>
    %32 = arith.mulf %29, %31 : vector<8x8xf32>
    %33 = arith.truncf %32 : vector<8x8xf32> to vector<8x8xbf16>
    %c0_17 = arith.constant 0 : index
    %c0_18 = arith.constant 0 : index
    %c0_19 = arith.constant 0 : index
    %34 = vector.load %arg11[%c0_17, %c0_18, %c0_19] : memref<1x8x32xbf16, #tpu.memory_space<vmem>>, vector<1x8x32xbf16>
    %35 = vector.shape_cast %34 : vector<1x8x32xbf16> to vector<8x32xbf16>
    %cst_20 = arith.constant dense<0.000000e+00> : vector<8x32xf32>
    %36 = tpu.matmul %33, %35, %cst_20 {dimension_numbers = #tpu.dot_dimension_numbers<[1], [0], [0], [1], [0, 0, 1, 1], [], []>} : vector<8x8xbf16>, vector<8x32xbf16>, vector<8x32xf32> -> vector<8x32xf32>
    %c0_i32_21 = arith.constant 0 : i32
    %37 = arith.cmpi eq, %arg2, %c0_i32_21 : i32
    %38 = arith.extui %37 : i1 to i32
    %c0_i32_22 = arith.constant 0 : i32
    %39 = arith.cmpi ne, %38, %c0_i32_22 : i32
    scf.if %39 {
      %cst_28 = arith.constant 0.000000e+00 : f32
      %46 = vector.broadcast %cst_28 : f32 to vector<8x32xf32>
      %c0_29 = arith.constant 0 : index
      %c0_30 = arith.constant 0 : index
      %47 = vector.load %arg14[%c0_29, %c0_30] : memref<8x32xf32, #tpu.memory_space<vmem>>, vector<8x32xf32>
      tpu.vector_store %arg14[%c0_29, %c0_30], %46 {strides = array<i32>} : memref<8x32xf32, #tpu.memory_space<vmem>>, vector<8x32xf32>,
    } else {
    }
    %c0_23 = arith.constant 0 : index
    %c0_24 = arith.constant 0 : index
    %40 = vector.load %arg14[%c0_23, %c0_24] : memref<8x32xf32, #tpu.memory_space<vmem>>, vector<8x32xf32>
    %41 = arith.addf %40, %36 : vector<8x32xf32>
    %c0_25 = arith.constant 0 : index
    %c0_26 = arith.constant 0 : index
    %42 = vector.load %arg14[%c0_25, %c0_26] : memref<8x32xf32, #tpu.memory_space<vmem>>, vector<8x32xf32>
    tpu.vector_store %arg14[%c0_25, %c0_26], %41 {strides = array<i32>} : memref<8x32xf32, #tpu.memory_space<vmem>>, vector<8x32xf32>,
    %c3_i32 = arith.constant 3 : i32
    %43 = arith.cmpi eq, %arg2, %c3_i32 : i32
    %44 = arith.extui %43 : i1 to i32
    %c0_i32_27 = arith.constant 0 : i32
    %45 = arith.cmpi ne, %44, %c0_i32_27 : i32
    scf.if %45 {
      %c0_28 = arith.constant 0 : index
      %c0_29 = arith.constant 0 : index
      %46 = vector.load %arg14[%c0_28, %c0_29] : memref<8x32xf32, #tpu.memory_space<vmem>>, vector<8x32xf32>
      %c0_30 = arith.constant 0 : index
      %c0_31 = arith.constant 0 : index
      %47 = vector.load %arg12[%c0_30, %c0_31] : memref<1x32xf32, #tpu.memory_space<vmem>>, vector<1x32xf32>
      %48 = vector.broadcast %47 : vector<1x32xf32> to vector<8x32xf32>
      %49 = arith.addf %46, %48 : vector<8x32xf32>
      %c0_32 = arith.constant 0 : index
      %c0_33 = arith.constant 0 : index
      %c0_34 = arith.constant 0 : index
      %50 = vector.load %arg13[%c0_32, %c0_33, %c0_34] : memref<1x8x32xf32, #tpu.memory_space<vmem>>, vector<1x8x32xf32>
      %51 = vector.shape_cast %50 : vector<1x8x32xf32> to vector<8x32xf32>
      %52 = vector.shape_cast %49 : vector<8x32xf32> to vector<1x8x32xf32>
      tpu.vector_store %arg13[%c0_32, %c0_33, %c0_34], %52 {strides = array<i32>} : memref<1x8x32xf32, #tpu.memory_space<vmem>>, vector<1x8x32xf32>,
    } else {
    }
    return
  }
  func.func @transform_0(%arg0: i32, %arg1: i32, %arg2: i32) -> (i32, i32, i32) {
    %c0_i32 = arith.constant 0 : i32
    %c0_i32_0 = arith.constant 0 : i32
    return %arg0, %arg1, %c0_i32 : i32, i32, i32
  }
  func.func @transform_1(%arg0: i32, %arg1: i32, %arg2: i32) -> (i32, i32, i32) {
    %c0_i32 = arith.constant 0 : i32
    %c0_i32_0 = arith.constant 0 : i32
    %c0_i32_1 = arith.constant 0 : i32
    return %arg0, %c0_i32, %c0_i32_0 : i32, i32, i32
  }
  func.func @transform_2(%arg0: i32, %arg1: i32, %arg2: i32) -> (i32, i32, i32) {
    %c0_i32 = arith.constant 0 : i32
    %c0_i32_0 = arith.constant 0 : i32
    %c0_i32_1 = arith.constant 0 : i32
    return %arg2, %c0_i32, %c0_i32_0 : i32, i32, i32
  }
  func.func @transform_3(%arg0: i32, %arg1: i32, %arg2: i32) -> (i32, i32, i32) {
    %c0_i32 = arith.constant 0 : i32
    %c0_i32_0 = arith.constant 0 : i32
    %c0_i32_1 = arith.constant 0 : i32
    return %arg2, %c0_i32, %c0_i32_0 : i32, i32, i32
  }
  func.func @transform_4(%arg0: i32, %arg1: i32, %arg2: i32) -> (i32, i32, i32) {
    %c0_i32 = arith.constant 0 : i32
    %c0_i32_0 = arith.constant 0 : i32
    %c0_i32_1 = arith.constant 0 : i32
    return %arg2, %c0_i32, %c0_i32_0 : i32, i32, i32
  }
  func.func @transform_5(%arg0: i32, %arg1: i32, %arg2: i32) -> (i32, i32, i32) {
    %c0_i32 = arith.constant 0 : i32
    %c0_i32_0 = arith.constant 0 : i32
    %c0_i32_1 = arith.constant 0 : i32
    return %arg2, %c0_i32, %c0_i32_0 : i32, i32, i32
  }
  func.func @transform_6(%arg0: i32, %arg1: i32, %arg2: i32) -> (i32, i32, i32) {
    %c0_i32 = arith.constant 0 : i32
    %c0_i32_0 = arith.constant 0 : i32
    %c0_i32_1 = arith.constant 0 : i32
    return %arg2, %c0_i32, %c0_i32_0 : i32, i32, i32
  }
  func.func @transform_7(%arg0: i32, %arg1: i32, %arg2: i32) -> (i32, i32, i32) {
    %c0_i32 = arith.constant 0 : i32
    %c0_i32_0 = arith.constant 0 : i32
    %c0_i32_1 = arith.constant 0 : i32
    return %arg2, %c0_i32, %c0_i32_0 : i32, i32, i32
  }
  func.func @transform_8(%arg0: i32, %arg1: i32, %arg2: i32) -> (i32, i32, i32) {
    %c0_i32 = arith.constant 0 : i32
    %c0_i32_0 = arith.constant 0 : i32
    %c0_i32_1 = arith.constant 0 : i32
    return %arg2, %c0_i32, %c0_i32_0 : i32, i32, i32
  }
  func.func @transform_9(%arg0: i32, %arg1: i32, %arg2: i32) -> (i32, i32) {
    %c0_i32 = arith.constant 0 : i32
    %c0_i32_0 = arith.constant 0 : i32
    %c0_i32_1 = arith.constant 0 : i32
    return %c0_i32, %c0_i32_0 : i32, i32
  }
  func.func @transform_10(%arg0: i32, %arg1: i32, %arg2: i32) -> (i32, i32, i32) {
    %c0_i32 = arith.constant 0 : i32
    %c0_i32_0 = arith.constant 0 : i32
    return %arg0, %arg1, %c0_i32 : i32, i32, i32
  }
}

</mosaic_0001>

<llo_original>
// kernel: tpu_custom_call.1
$region0: #{tpu_custom_call.1}
  #allocation0 [shape = 'u32[]', space=smem, size = 0x4, offset = 0x4, fixed_abs, tag = 'smem constant byte address 0x4 - core index']
  #allocation1 [shape = 'u32[72,128]{1,0:T(1,128)}', space=vmem, size = 0x9000, scoped, tag = 'internal scratch']
  #allocation2 [shape = 'f32[8,32]{1,0:T(8,128)}', space=vmem, size = 0x1000, scoped, tag = 'scratch operand']
  #allocation3 [shape = 'bf16[4,8,8]{2,1,0:T(8,128)(2,1)}', space=vmem, size = 0x2000, scoped, tag = 'scratch operand']
  #allocation4 [shape = 'bf16[4,8,8]{2,1,0:T(8,128)(2,1)}', space=vmem, size = 0x2000, scoped, tag = 'scratch operand']
  %s0 = inlined_call_operand.vmem [shape: bf16[2,8,32], index: 0, kind: input, shape index: {}]
  %s1 = inlined_call_operand.vmem [shape: bf16[2,8,32], index: 1, kind: input, shape index: {}]
  %s2 = inlined_call_operand.vmem [shape: bf16[4,32,8], index: 2, kind: input, shape index: {}]
  %s3 = inlined_call_operand.vmem [shape: f32[4,1,8], index: 3, kind: input, shape index: {}]
  %s4 = inlined_call_operand.vmem [shape: bf16[4,32,8], index: 4, kind: input, shape index: {}]
  %s5 = inlined_call_operand.vmem [shape: f32[4,1,8], index: 5, kind: input, shape index: {}]
  %s6 = inlined_call_operand.vmem [shape: bf16[4,32,8], index: 6, kind: input, shape index: {}]
  %s7 = inlined_call_operand.vmem [shape: f32[4,1,8], index: 7, kind: input, shape index: {}]
  %s8 = inlined_call_operand.vmem [shape: bf16[4,8,32], index: 8, kind: input, shape index: {}]
  %s9 = inlined_call_operand.vmem [shape: f32[1,32], index: 9, kind: input, shape index: {}]
  %s10 = inlined_call_operand.hbm [shape: f32[2,8,32], index: 10, kind: output, shape index: {}]
  %s11 = sld [smem:[#allocation0]]
  $region85: #{tpu_custom_call.1} parent=0
    _
  %s13 = ssub.s32 1, %s11
  %s14 = scalar_select 0, %s13, %s11
  $region1: #{tpu_custom_call.1} parent=0
    #allocation5 [shape = 'u8[8192]{0}', space=vmem, size = 0x2000, scoped, tag = 'output window, operand 0']
    #allocation6 [shape = 's32[2]{0}', space=sflag, size = 0x8, scoped, tag = 'scoped memory for tpu_custom_call.1']
    %15 = vsyncpa [#allocation6], 0
    %s16 = scalar_lea.sflag [#allocation6], 1
    %17 = vsyncpa %s16, 0
    loop: start=0, step=1, limit=10
    $region2: #{tpu_custom_call.1} parent=1 // loop_pre_header
      _
    $region3: #{tpu_custom_call.1} parent=1 // loop_header
      %s19 = sphi 0, %s23
      %p20 = scmp.ge.s32.totalorder %s19, 10
      %s26 = sphi 0, %s45
      %s27 = sphi 0, %s41
      %s28 = sphi 0, %s37
      %s29 = sphi 0, %s26
      %s30 = sphi 0, %s27
      %s31 = sphi 0, %s28
      %s32 = sphi 0, %s29
      %s33 = sphi 0, %s30
      %s34 = sphi 0, %s31
      %s50 = sphi 0, %s52
      %s53 = sphi 0, %s50
      %s54 = sphi 0, %s53
      %s70 = sphi 0, %s54
      %s76 = sphi 0, %s78
      %s79 = sphi 0, %s76
      %s80 = sphi 0, %s79
      %s96 = sphi 0, %s80
      %s102 = sphi 0, %s104
      %s105 = sphi 0, %s102
      %s106 = sphi 0, %s105
      %s122 = sphi 0, %s106
      %s128 = sphi 0, %s130
      %s131 = sphi 0, %s128
      %s132 = sphi 0, %s131
      %s148 = sphi 0, %s132
      %s154 = sphi 0, %s156
      %s157 = sphi 0, %s154
      %s158 = sphi 0, %s157
      %s174 = sphi 0, %s158
      %s180 = sphi 0, %s182
      %s183 = sphi 0, %s180
      %s184 = sphi 0, %s183
      %s200 = sphi 0, %s184
      %s206 = sphi 0, %s208
      %s209 = sphi 0, %s206
      %s210 = sphi 0, %s209
      %s226 = sphi 0, %s210
      %s232 = sphi 0, %s234
      %s235 = sphi 0, %s232
      %s236 = sphi 0, %s235
      %s252 = sphi 0, %s236
      %s258 = sphi 0, %s260
      %s261 = sphi 0, %s258
      %s262 = sphi 0, %s261
      %s278 = sphi 0, %s262
      %s282 = sphi 0, %s282
      %s284 = sphi 0, %s282
      %s285 = sphi 0, %s284
      %s299 = sphi 0, %s285
      %s307 = sphi 0, %s309
      %s310 = sphi 0, %s307
      %s311 = sphi 0, %s310
      %s327 = sphi 0, %s311
    $region4: #{tpu_custom_call.1} parent=1 // loop_header_branch
      %22 = sbr.rel (%p20) target = $region8
    $region5: #{tpu_custom_call.1} parent=1 // loop_body
      %s24 = ssub.s32 %s19, 1
      %s25 = ssub.s32 %s19, 2
      %s35 = sadd.s32 1, %s28
      %p36 = scmp.ge.s32.totalorder %s35, 4
      %s37 = scalar_select %p36, 0, %s35
      %s38 = sadd.s32 1, %s27
      %s39 = scalar_select %p36, %s38, %s27
      %p40 = scmp.ge.s32.totalorder %s39, 1
      %s41 = scalar_select %p40, 0, %s39
      %s42 = sadd.s32 1, %s26
      %s43 = scalar_select %p40, %s42, %s26
      %p44 = scmp.ge.s32.totalorder %s43, 2
      %s45 = scalar_select %p44, 0, %s43
      %s46 = ssub.s32 %s26, %s45
      %s47 = ssub.s32 %s27, %s41
      %s48 = sor.u32 %s46, %s47
      %p49 = scmp.eq.s32.totalorder %s48, 0
      %s51 = sadd.s32 %s50, 1
      %s52 = scalar_select %p49, %s50, %s51
      %p55 = pneg %p49
      %p56 = scmp.eq.s32.totalorder %s19, 7
      %p57 = por %p55, %p56
      %p58 = scmp.ne.s32.totalorder %s50, %s53
      %p59 = scmp.eq.s32.totalorder %s19, 0
      %p60 = por %p58, %p59
      %p61 = scmp.ne.s32.totalorder %s50, %s53
      %p62 = scmp.eq.s32.totalorder %s24, 7
      %p63 = por %p61, %p62
      %p64 = scmp.ne.s32.totalorder %s53, %s54
      %p65 = scmp.eq.s32.totalorder %s24, 0
      %p66 = por %p64, %p65
      %p67 = scmp.ne.s32.totalorder %s53, %s54
      %p68 = scmp.eq.s32.totalorder %s25, 7
      %p69 = por %p67, %p68
      %p71 = scmp.ne.s32.totalorder %s54, %s70
      %p72 = scmp.eq.s32.totalorder %s25, 0
      %p73 = por %p71, %p72
      %s74 = ssub.s32 %s26, %s45
      %p75 = scmp.eq.s32.totalorder %s74, 0
      %s77 = sadd.s32 %s76, 1
      %s78 = scalar_select %p75, %s76, %s77
      %p81 = pneg %p75
      %p82 = scmp.eq.s32.totalorder %s19, 7
      %p83 = por %p81, %p82
      %p84 = scmp.ne.s32.totalorder %s76, %s79
      %p85 = scmp.eq.s32.totalorder %s19, 0
      %p86 = por %p84, %p85
      %p87 = scmp.ne.s32.totalorder %s76, %s79
      %p88 = scmp.eq.s32.totalorder %s24, 7
      %p89 = por %p87, %p88
      %p90 = scmp.ne.s32.totalorder %s79, %s80
      %p91 = scmp.eq.s32.totalorder %s24, 0
      %p92 = por %p90, %p91
      %p93 = scmp.ne.s32.totalorder %s79, %s80
      %p94 = scmp.eq.s32.totalorder %s25, 7
      %p95 = por %p93, %p94
      %p97 = scmp.ne.s32.totalorder %s80, %s96
      %p98 = scmp.eq.s32.totalorder %s25, 0
      %p99 = por %p97, %p98
      %s100 = ssub.s32 %s28, %s37
      %p101 = scmp.eq.s32.totalorder %s100, 0
      %s103 = sadd.s32 %s102, 1
      %s104 = scalar_select %p101, %s102, %s103
      %p107 = pneg %p101
      %p108 = scmp.eq.s32.totalorder %s19, 7
      %p109 = por %p107, %p108
      %p110 = scmp.ne.s32.totalorder %s102, %s105
      %p111 = scmp.eq.s32.totalorder %s19, 0
      %p112 = por %p110, %p111
      %p113 = scmp.ne.s32.totalorder %s102, %s105
      %p114 = scmp.eq.s32.totalorder %s24, 7
      %p115 = por %p113, %p114
      %p116 = scmp.ne.s32.totalorder %s105, %s106
      %p117 = scmp.eq.s32.totalorder %s24, 0
      %p118 = por %p116, %p117
      %p119 = scmp.ne.s32.totalorder %s105, %s106
      %p120 = scmp.eq.s32.totalorder %s25, 7
      %p121 = por %p119, %p120
      %p123 = scmp.ne.s32.totalorder %s106, %s122
      %p124 = scmp.eq.s32.totalorder %s25, 0
      %p125 = por %p123, %p124
      %s126 = ssub.s32 %s28, %s37
      %p127 = scmp.eq.s32.totalorder %s126, 0
      %s129 = sadd.s32 %s128, 1
      %s130 = scalar_select %p127, %s128, %s129
      %p133 = pneg %p127
      %p134 = scmp.eq.s32.totalorder %s19, 7
      %p135 = por %p133, %p134
      %p136 = scmp.ne.s32.totalorder %s128, %s131
      %p137 = scmp.eq.s32.totalorder %s19, 0
      %p138 = por %p136, %p137
      %p139 = scmp.ne.s32.totalorder %s128, %s131
      %p140 = scmp.eq.s32.totalorder %s24, 7
      %p141 = por %p139, %p140
      %p142 = scmp.ne.s32.totalorder %s131, %s132
      %p143 = scmp.eq.s32.totalorder %s24, 0
      %p144 = por %p142, %p143
      %p145 = scmp.ne.s32.totalorder %s131, %s132
      %p146 = scmp.eq.s32.totalorder %s25, 7
      %p147 = por %p145, %p146
      %p149 = scmp.ne.s32.totalorder %s132, %s148
      %p150 = scmp.eq.s32.totalorder %s25, 0
      %p151 = por %p149, %p150
      %s152 = ssub.s32 %s28, %s37
      %p153 = scmp.eq.s32.totalorder %s152, 0
      %s155 = sadd.s32 %s154, 1
      %s156 = scalar_select %p153, %s154, %s155
      %p159 = pneg %p153
      %p160 = scmp.eq.s32.totalorder %s19, 7
      %p161 = por %p159, %p160
      %p162 = scmp.ne.s32.totalorder %s154, %s157
      %p163 = scmp.eq.s32.totalorder %s19, 0
      %p164 = por %p162, %p163
      %p165 = scmp.ne.s32.totalorder %s154, %s157
      %p166 = scmp.eq.s32.totalorder %s24, 7
      %p167 = por %p165, %p166
      %p168 = scmp.ne.s32.totalorder %s157, %s158
      %p169 = scmp.eq.s32.totalorder %s24, 0
      %p170 = por %p168, %p169
      %p171 = scmp.ne.s32.totalorder %s157, %s158
      %p172 = scmp.eq.s32.totalorder %s25, 7
      %p173 = por %p171, %p172
      %p175 = scmp.ne.s32.totalorder %s158, %s174
      %p176 = scmp.eq.s32.totalorder %s25, 0
      %p177 = por %p175, %p176
      %s178 = ssub.s32 %s28, %s37
      %p179 = scmp.eq.s32.totalorder %s178, 0
      %s181 = sadd.s32 %s180, 1
      %s182 = scalar_select %p179, %s180, %s181
      %p185 = pneg %p179
      %p186 = scmp.eq.s32.totalorder %s19, 7
      %p187 = por %p185, %p186
      %p188 = scmp.ne.s32.totalorder %s180, %s183
      %p189 = scmp.eq.s32.totalorder %s19, 0
      %p190 = por %p188, %p189
      %p191 = scmp.ne.s32.totalorder %s180, %s183
      %p192 = scmp.eq.s32.totalorder %s24, 7
      %p193 = por %p191, %p192
      %p194 = scmp.ne.s32.totalorder %s183, %s184
      %p195 = scmp.eq.s32.totalorder %s24, 0
      %p196 = por %p194, %p195
      %p197 = scmp.ne.s32.totalorder %s183, %s184
      %p198 = scmp.eq.s32.totalorder %s25, 7
      %p199 = por %p197, %p198
      %p201 = scmp.ne.s32.totalorder %s184, %s200
      %p202 = scmp.eq.s32.totalorder %s25, 0
      %p203 = por %p201, %p202
      %s204 = ssub.s32 %s28, %s37
      %p205 = scmp.eq.s32.totalorder %s204, 0
      %s207 = sadd.s32 %s206, 1
      %s208 = scalar_select %p205, %s206, %s207
      %p211 = pneg %p205
      %p212 = scmp.eq.s32.totalorder %s19, 7
      %p213 = por %p211, %p212
      %p214 = scmp.ne.s32.totalorder %s206, %s209
      %p215 = scmp.eq.s32.totalorder %s19, 0
      %p216 = por %p214, %p215
      %p217 = scmp.ne.s32.totalorder %s206, %s209
      %p218 = scmp.eq.s32.totalorder %s24, 7
      %p219 = por %p217, %p218
      %p220 = scmp.ne.s32.totalorder %s209, %s210
      %p221 = scmp.eq.s32.totalorder %s24, 0
      %p222 = por %p220, %p221
      %p223 = scmp.ne.s32.totalorder %s209, %s210
      %p224 = scmp.eq.s32.totalorder %s25, 7
      %p225 = por %p223, %p224
      %p227 = scmp.ne.s32.totalorder %s210, %s226
      %p228 = scmp.eq.s32.totalorder %s25, 0
      %p229 = por %p227, %p228
      %s230 = ssub.s32 %s28, %s37
      %p231 = scmp.eq.s32.totalorder %s230, 0
      %s233 = sadd.s32 %s232, 1
      %s234 = scalar_select %p231, %s232, %s233
      %p237 = pneg %p231
      %p238 = scmp.eq.s32.totalorder %s19, 7
      %p239 = por %p237, %p238
      %p240 = scmp.ne.s32.totalorder %s232, %s235
      %p241 = scmp.eq.s32.totalorder %s19, 0
      %p242 = por %p240, %p241
      %p243 = scmp.ne.s32.totalorder %s232, %s235
      %p244 = scmp.eq.s32.totalorder %s24, 7
      %p245 = por %p243, %p244
      %p246 = scmp.ne.s32.totalorder %s235, %s236
      %p247 = scmp.eq.s32.totalorder %s24, 0
      %p248 = por %p246, %p247
      %p249 = scmp.ne.s32.totalorder %s235, %s236
      %p250 = scmp.eq.s32.totalorder %s25, 7
      %p251 = por %p249, %p250
      %p253 = scmp.ne.s32.totalorder %s236, %s252
      %p254 = scmp.eq.s32.totalorder %s25, 0
      %p255 = por %p253, %p254
      %s256 = ssub.s32 %s28, %s37
      %p257 = scmp.eq.s32.totalorder %s256, 0
      %s259 = sadd.s32 %s258, 1
      %s260 = scalar_select %p257, %s258, %s259
      %p263 = pneg %p257
      %p264 = scmp.eq.s32.totalorder %s19, 7
      %p265 = por %p263, %p264
      %p266 = scmp.ne.s32.totalorder %s258, %s261
      %p267 = scmp.eq.s32.totalorder %s19, 0
      %p268 = por %p266, %p267
      %p269 = scmp.ne.s32.totalorder %s258, %s261
      %p270 = scmp.eq.s32.totalorder %s24, 7
      %p271 = por %p269, %p270
      %p272 = scmp.ne.s32.totalorder %s261, %s262
      %p273 = scmp.eq.s32.totalorder %s24, 0
      %p274 = por %p272, %p273
      %p275 = scmp.ne.s32.totalorder %s261, %s262
      %p276 = scmp.eq.s32.totalorder %s25, 7
      %p277 = por %p275, %p276
      %p279 = scmp.ne.s32.totalorder %s262, %s278
      %p280 = scmp.eq.s32.totalorder %s25, 0
      %p281 = por %p279, %p280
      %s283 = sadd.s32 %s282, 1
      %p286 = scmp.eq.s32.totalorder %s19, 7
      %p287 = scmp.ne.s32.totalorder %s282, %s284
      %p288 = scmp.eq.s32.totalorder %s19, 0
      %p289 = por %p287, %p288
      %p290 = scmp.ne.s32.totalorder %s282, %s284
      %p291 = scmp.eq.s32.totalorder %s24, 7
      %p292 = por %p290, %p291
      %p293 = scmp.ne.s32.totalorder %s284, %s285
      %p294 = scmp.eq.s32.totalorder %s24, 0
      %p295 = por %p293, %p294
      %p296 = scmp.ne.s32.totalorder %s284, %s285
      %p297 = scmp.eq.s32.totalorder %s25, 7
      %p298 = por %p296, %p297
      %p300 = scmp.ne.s32.totalorder %s285, %s299
      %p301 = scmp.eq.s32.totalorder %s25, 0
      %p302 = por %p300, %p301
      %s303 = ssub.s32 %s26, %s45
      %s304 = ssub.s32 %s27, %s41
      %s305 = sor.u32 %s303, %s304
      %p306 = scmp.eq.s32.totalorder %s305, 0
      %s308 = sadd.s32 %s307, 1
      %s309 = scalar_select %p306, %s307, %s308
      %p312 = pneg %p306
      %p313 = scmp.eq.s32.totalorder %s19, 7
      %p314 = por %p312, %p313
      %p315 = scmp.ne.s32.totalorder %s307, %s310
      %p316 = scmp.eq.s32.totalorder %s19, 0
      %p317 = por %p315, %p316
      %p318 = scmp.ne.s32.totalorder %s307, %s310
      %p319 = scmp.eq.s32.totalorder %s24, 7
      %p320 = por %p318, %p319
      %p321 = scmp.ne.s32.totalorder %s310, %s311
      %p322 = scmp.eq.s32.totalorder %s24, 0
      %p323 = por %p321, %p322
      %p324 = scmp.ne.s32.totalorder %s310, %s311
      %p325 = scmp.eq.s32.totalorder %s25, 7
      %p326 = por %p324, %p325
      %p328 = scmp.ne.s32.totalorder %s311, %s327
      %p329 = scmp.eq.s32.totalorder %s25, 0
      %p330 = por %p328, %p329
      %p331 = scmp.le.s32.totalorder 1, %s19
      %p332 = scmp.lt.s32.totalorder %s19, 9
      %p333 = pnand %p331, %p332
      %p334 = pneg %p333
      // Predicated region
      $region9: #{tpu_custom_call.1} parent=5 // pred_check
        _
      $region10: #{tpu_custom_call.1} parent=5 // pred_check_branch
        %336 = sbr.rel (%p333) target = $region12
      $region11: #{tpu_custom_call.1} parent=5 // pred_region
        %s337 = ssub.s32 %s19, 1
        // Predicated region
        $region13: #{tpu_custom_call.1} parent=11 // pred_check
          %p338 = pneg %p92
        $region14: #{tpu_custom_call.1} parent=11 // pred_check_branch
          %340 = sbr.rel (%p338) target = $region16
        $region15: #{tpu_custom_call.1} parent=11 // pred_region
          %p341 = scmp.lt.s32.totalorder %s29, 1
          %s342 = scalar_select %p341, %s29, 1
          %s343 = smul.addr %s342, 4
          %s344 = scalar_lea.vmem %s1, %s343
        $region16: #{tpu_custom_call.1} parent=11 // pred_fallthru
          _
        // Predicated region
        $region17: #{tpu_custom_call.1} parent=11 // pred_check
          %p345 = pneg %p295
        $region18: #{tpu_custom_call.1} parent=11 // pred_check_branch
          %347 = sbr.rel (%p345) target = $region20
        $region19: #{tpu_custom_call.1} parent=11 // pred_region
          _
        $region20: #{tpu_custom_call.1} parent=11 // pred_fallthru
          _
      $region12: #{tpu_custom_call.1} parent=5 // pred_fallthru
        _
      %p348 = scmp.lt.s32.totalorder %s19, 8
      // Predicated region
      $region21: #{tpu_custom_call.1} parent=5 // pred_check
        %p349 = pneg %p348
      $region22: #{tpu_custom_call.1} parent=5 // pred_check_branch
        %351 = sbr.rel (%p349) target = $region24
      $region23: #{tpu_custom_call.1} parent=5 // pred_region
        // Predicated region
        $region25: #{tpu_custom_call.1} parent=23 // pred_check
          %p352 = pneg %p60
        $region26: #{tpu_custom_call.1} parent=23 // pred_check_branch
          %354 = sbr.rel (%p352) target = $region28
        $region27: #{tpu_custom_call.1} parent=23 // pred_region
          %p355 = scmp.lt.s32.totalorder %s26, 1
          %s356 = scalar_select %p355, %s26, 1
          %p357 = scmp.lt.s32.totalorder %s27, 0
          %s358 = scalar_select %p357, %s27, 0
          %s359 = sadd.s32 %s358, %s356
          %s360 = smul.addr %s359, 4
          %s361 = scalar_lea.vmem %s0, %s360
        $region28: #{tpu_custom_call.1} parent=23 // pred_fallthru
          _
        // Predicated region
        $region29: #{tpu_custom_call.1} parent=23 // pred_check
          %p362 = pneg %p112
        $region30: #{tpu_custom_call.1} parent=23 // pred_check_branch
          %364 = sbr.rel (%p362) target = $region32
        $region31: #{tpu_custom_call.1} parent=23 // pred_region
          %p365 = scmp.lt.s32.totalorder %s28, 3
          %s366 = scalar_select %p365, %s28, 3
          %s367 = smul.addr %s366, 4
          %s368 = smul.addr %s367, 4
          %s369 = scalar_lea.vmem %s2, %s368
        $region32: #{tpu_custom_call.1} parent=23 // pred_fallthru
          _
        // Predicated region
        $region33: #{tpu_custom_call.1} parent=23 // pred_check
          %p370 = pneg %p138
        $region34: #{tpu_custom_call.1} parent=23 // pred_check_branch
          %372 = sbr.rel (%p370) target = $region36
        $region35: #{tpu_custom_call.1} parent=23 // pred_region
          %p373 = scmp.lt.s32.totalorder %s28, 3
          %s374 = scalar_select %p373, %s28, 3
          %s375 = scalar_lea.vmem %s3, %s374
        $region36: #{tpu_custom_call.1} parent=23 // pred_fallthru
          _
        // Predicated region
        $region37: #{tpu_custom_call.1} parent=23 // pred_check
          %p376 = pneg %p164
        $region38: #{tpu_custom_call.1} parent=23 // pred_check_branch
          %378 = sbr.rel (%p376) target = $region40
        $region39: #{tpu_custom_call.1} parent=23 // pred_region
          %p379 = scmp.lt.s32.totalorder %s28, 3
          %s380 = scalar_select %p379, %s28, 3
          %s381 = smul.addr %s380, 4
          %s382 = smul.addr %s381, 4
          %s383 = scalar_lea.vmem %s4, %s382
        $region40: #{tpu_custom_call.1} parent=23 // pred_fallthru
          _
        // Predicated region
        $region41: #{tpu_custom_call.1} parent=23 // pred_check
          %p384 = pneg %p190
        $region42: #{tpu_custom_call.1} parent=23 // pred_check_branch
          %386 = sbr.rel (%p384) target = $region44
        $region43: #{tpu_custom_call.1} parent=23 // pred_region
          %p387 = scmp.lt.s32.totalorder %s28, 3
          %s388 = scalar_select %p387, %s28, 3
          %s389 = scalar_lea.vmem %s5, %s388
        $region44: #{tpu_custom_call.1} parent=23 // pred_fallthru
          _
        // Predicated region
        $region45: #{tpu_custom_call.1} parent=23 // pred_check
          %p390 = pneg %p216
        $region46: #{tpu_custom_call.1} parent=23 // pred_check_branch
          %392 = sbr.rel (%p390) target = $region48
        $region47: #{tpu_custom_call.1} parent=23 // pred_region
          %p393 = scmp.lt.s32.totalorder %s28, 3
          %s394 = scalar_select %p393, %s28, 3
          %s395 = smul.addr %s394, 4
          %s396 = smul.addr %s395, 4
          %s397 = scalar_lea.vmem %s6, %s396
        $region48: #{tpu_custom_call.1} parent=23 // pred_fallthru
          _
        // Predicated region
        $region49: #{tpu_custom_call.1} parent=23 // pred_check
          %p398 = pneg %p242
        $region50: #{tpu_custom_call.1} parent=23 // pred_check_branch
          %400 = sbr.rel (%p398) target = $region52
        $region51: #{tpu_custom_call.1} parent=23 // pred_region
          %p401 = scmp.lt.s32.totalorder %s28, 3
          %s402 = scalar_select %p401, %s28, 3
          %s403 = scalar_lea.vmem %s7, %s402
        $region52: #{tpu_custom_call.1} parent=23 // pred_fallthru
          _
        // Predicated region
        $region53: #{tpu_custom_call.1} parent=23 // pred_check
          %p404 = pneg %p268
        $region54: #{tpu_custom_call.1} parent=23 // pred_check_branch
          %406 = sbr.rel (%p404) target = $region56
        $region55: #{tpu_custom_call.1} parent=23 // pred_region
          %p407 = scmp.lt.s32.totalorder %s28, 3
          %s408 = scalar_select %p407, %s28, 3
          %s409 = smul.addr %s408, 4
          %s410 = scalar_lea.vmem %s8, %s409
        $region56: #{tpu_custom_call.1} parent=23 // pred_fallthru
          _
      $region24: #{tpu_custom_call.1} parent=5 // pred_fallthru
        _
      %p411 = scmp.le.s32.totalorder 1, %s19
      %p412 = scmp.lt.s32.totalorder %s19, 9
      %p413 = pnand %p411, %p412
      %p414 = pneg %p413
      // Predicated region
      $region57: #{tpu_custom_call.1} parent=5 // pred_check
        _
      $region58: #{tpu_custom_call.1} parent=5 // pred_check_branch
        %416 = sbr.rel (%p413) target = $region60
      $region59: #{tpu_custom_call.1} parent=5 // pred_region
        %s417 = ssub.s32 %s19, 1
        %p418 = scmp.lt.s32.totalorder %s29, 1
        %s419 = scalar_select %p418, %s29, 1
        %p420 = scmp.lt.s32.totalorder %s30, 0
        %s421 = scalar_select %p420, %s30, 0
        %s422 = sadd.s32 %s421, %s419
        %s423 = smul.addr %s422, 4
        %s424 = scalar_lea.vmem %s0, %s423
        %p425 = pneg %p66
        %p426 = pneg %p63
        %p427 = scmp.lt.s32.totalorder %s29, 1
        %s428 = scalar_select %p427, %s29, 1
        %s429 = smul.addr %s428, 4
        %s430 = scalar_lea.vmem %s1, %s429
        %p431 = pneg %p92
        %p432 = pneg %p89
        %p433 = scmp.lt.s32.totalorder %s31, 3
        %s434 = scalar_select %p433, %s31, 3
        %s435 = smul.addr %s434, 4
        %s436 = smul.addr %s435, 4
        %s437 = scalar_lea.vmem %s2, %s436
        %p438 = pneg %p118
        %p439 = pneg %p115
        %p440 = scmp.lt.s32.totalorder %s31, 3
        %s441 = scalar_select %p440, %s31, 3
        %s442 = scalar_lea.vmem %s3, %s441
        %p443 = pneg %p144
        %p444 = pneg %p141
        %p445 = scmp.lt.s32.totalorder %s31, 3
        %s446 = scalar_select %p445, %s31, 3
        %s447 = smul.addr %s446, 4
        %s448 = smul.addr %s447, 4
        %s449 = scalar_lea.vmem %s4, %s448
        %p450 = pneg %p170
        %p451 = pneg %p167
        %p452 = scmp.lt.s32.totalorder %s31, 3
        %s453 = scalar_select %p452, %s31, 3
        %s454 = scalar_lea.vmem %s5, %s453
        %p455 = pneg %p196
        %p456 = pneg %p193
        %p457 = scmp.lt.s32.totalorder %s31, 3
        %s458 = scalar_select %p457, %s31, 3
        %s459 = smul.addr %s458, 4
        %s460 = smul.addr %s459, 4
        %s461 = scalar_lea.vmem %s6, %s460
        %p462 = pneg %p222
        %p463 = pneg %p219
        %p464 = scmp.lt.s32.totalorder %s31, 3
        %s465 = scalar_select %p464, %s31, 3
        %s466 = scalar_lea.vmem %s7, %s465
        %p467 = pneg %p248
        %p468 = pneg %p245
        %p469 = scmp.lt.s32.totalorder %s31, 3
        %s470 = scalar_select %p469, %s31, 3
        %s471 = smul.addr %s470, 4
        %s472 = scalar_lea.vmem %s8, %s471
        %p473 = pneg %p274
        %p474 = pneg %p271
        %p475 = pneg %p295
        %p476 = pneg %p292
        %p477 = pneg %p323
        %p478 = pneg %p320
        %s479 = sand.u32 %s310, 1
        %s480 = scalar_lea.sflag [#allocation6], %s479
        %s481 = sand.u32 %s310, 1
        %s482 = smul.addr %s481, 8
        %s483 = scalar_lea.vmem [#allocation5], %s482
        %p484 = scmp.lt.s32.totalorder %s29, 1
        %s485 = scalar_select %p484, %s29, 1
        %p486 = scmp.lt.s32.totalorder %s30, 0
        %s487 = scalar_select %p486, %s30, 0
        %s488 = sadd.s32 %s487, %s485
        %s489 = smul.addr %s488, 4
        %s490 = scalar_lea.vmem %s0, %s489
        %p491 = scmp.lt.s32.totalorder %s29, 1
        %s492 = scalar_select %p491, %s29, 1
        %s493 = smul.addr %s492, 4
        %s494 = scalar_lea.vmem %s1, %s493
        %p495 = scmp.lt.s32.totalorder %s31, 3
        %s496 = scalar_select %p495, %s31, 3
        %s497 = smul.addr %s496, 4
        %s498 = smul.addr %s497, 4
        %s499 = scalar_lea.vmem %s2, %s498
        %p500 = scmp.lt.s32.totalorder %s31, 3
        %s501 = scalar_select %p500, %s31, 3
        %s502 = scalar_lea.vmem %s3, %s501
        %p503 = scmp.lt.s32.totalorder %s31, 3
        %s504 = scalar_select %p503, %s31, 3
        %s505 = smul.addr %s504, 4
        %s506 = smul.addr %s505, 4
        %s507 = scalar_lea.vmem %s4, %s506
        %p508 = scmp.lt.s32.totalorder %s31, 3
        %s509 = scalar_select %p508, %s31, 3
        %s510 = scalar_lea.vmem %s5, %s509
        %p511 = scmp.lt.s32.totalorder %s31, 3
        %s512 = scalar_select %p511, %s31, 3
        %s513 = smul.addr %s512, 4
        %s514 = smul.addr %s513, 4
        %s515 = scalar_lea.vmem %s6, %s514
        %p516 = scmp.lt.s32.totalorder %s31, 3
        %s517 = scalar_select %p516, %s31, 3
        %s518 = scalar_lea.vmem %s7, %s517
        %p519 = scmp.lt.s32.totalorder %s31, 3
        %s520 = scalar_select %p519, %s31, 3
        %s521 = smul.addr %s520, 4
        %s522 = scalar_lea.vmem %s8, %s521
        %p524 = scmp.eq.s32.totalorder %s30, 0
        // Predicated region
        $region61: #{tpu_custom_call.1} parent=59 // pred_check
          %p525 = pneg %p524
        $region62: #{tpu_custom_call.1} parent=59 // pred_check_branch
          %527 = sbr.rel (%p525) target = $region64
        $region63: #{tpu_custom_call.1} parent=59 // pred_region
          %v528 = vld [vmem:[%s494] sm:$0xf]
          %v529 = vld [vmem:[%s507] sm:$0xf]
          %v530 = vld [vmem:[%s507 + $0x4] sm:$0xf]
          %v531 = vld [vmem:[%s507 + $0x8] sm:$0xf]
          %v532 = vld [vmem:[%s507 + $0xc] sm:$0xf]
          %v533 = vld [vmem:[%s510] sm:$0x1]
          %v535 = vperm.slane %v533, 0
          %v541 = vunpack.c.l.b16 %v529
          %v542 = vunpack.c.l.b16 %v530
          %v543 = vunpack.c.l.b16 %v531
          %v544 = vunpack.c.l.b16 %v532
          %v545 = vpack.c.b16 %v542, %v541
          %v546 = vpack.c.b16 %v544, %v543
          %vm549 = vcmask 261120
          %v551 = vsel %vm549, %v528, 0
          %553 = vmatpush.bf16.msra.mxu0 0
          %554 = vmatpush.bf16.msra.mxu0 0
          %555 = vmatpush.bf16.msra.mxu0 0
          %556 = vmatpush.bf16.msra.mxu0 0
          %557 = vmatpush.bf16.msra.mxu0 0
          %558 = vmatpush.bf16.msra.mxu0 0
          %559 = vmatpush.bf16.msra.mxu0 %v546
          %560 = vmatpush.bf16.msra.mxu0 %v545
          %561 = vmatmul.bf16.gmra.mxu0 %v551
          %v562 = vpop.f32.mrf.mxu0
          %v563 = vadd.f32 %v535, %v562
          %v564 = vpop.f32.mrf.mxu0
          %565 = vdwg.mxu0
          %v566 = vld [vmem:[%s515] sm:$0xf]
          %v567 = vld [vmem:[%s515 + $0x4] sm:$0xf]
          %v568 = vld [vmem:[%s515 + $0x8] sm:$0xf]
          %v569 = vld [vmem:[%s515 + $0xc] sm:$0xf]
          %v570 = vld [vmem:[%s518] sm:$0x1]
          %v572 = vperm.slane %v570, 0
          %v578 = vunpack.c.l.b16 %v566
          %v579 = vunpack.c.l.b16 %v567
          %v580 = vunpack.c.l.b16 %v568
          %v581 = vunpack.c.l.b16 %v569
          %v582 = vpack.c.b16 %v579, %v578
          %v583 = vpack.c.b16 %v581, %v580
          %586 = vmatpush.bf16.msra.mxu0 0
          %587 = vmatpush.bf16.msra.mxu0 0
          %588 = vmatpush.bf16.msra.mxu0 0
          %589 = vmatpush.bf16.msra.mxu0 0
          %590 = vmatpush.bf16.msra.mxu0 0
          %591 = vmatpush.bf16.msra.mxu0 0
          %592 = vmatpush.bf16.msra.mxu0 %v583
          %593 = vmatpush.bf16.msra.mxu0 %v582
          %594 = vmatmul.bf16.gmra.mxu0 %v551
          %v595 = vpop.f32.mrf.mxu0
          %v596 = vadd.f32 %v572, %v595
          %v597 = vpop.f32.mrf.mxu0
          %598 = vdwg.mxu0
          %v599 = vpack.c.bf16 %v563, %v563
          %s600 = smul.addr %s31, 4
          %s601 = scalar_lea.vmem [#allocation3], %s600
          %vm602 = vcmask 60416
          %603 = vst.msk [vmem:[%s601] sm:$0xf] %vm602, %v599
          %v604 = vpack.c.bf16 %v596, %v596
          %s605 = smul.addr %s31, 4
          %s606 = scalar_lea.vmem [#allocation4], %s605
          %607 = vst.msk [vmem:[%s606] sm:$0xf] %vm602, %v604
        $region64: #{tpu_custom_call.1} parent=59 // pred_fallthru
          _
        %v608 = vld [vmem:[%s490] sm:$0xf]
        %v609 = vld [vmem:[%s499] sm:$0xf]
        %v610 = vld [vmem:[%s499 + $0x4] sm:$0xf]
        %v611 = vld [vmem:[%s499 + $0x8] sm:$0xf]
        %v612 = vld [vmem:[%s499 + $0xc] sm:$0xf]
        %v613 = vld [vmem:[%s502] sm:$0x1]
        %v615 = vperm.slane %v613, 0
        %v621 = vunpack.c.l.b16 %v609
        %v622 = vunpack.c.l.b16 %v610
        %v623 = vunpack.c.l.b16 %v611
        %v624 = vunpack.c.l.b16 %v612
        %v625 = vpack.c.b16 %v622, %v621
        %v626 = vpack.c.b16 %v624, %v623
        %vm629 = vcmask 261120
        %v631 = vsel %vm629, %v608, 0
        %633 = vmatpush.bf16.msra.mxu0 0
        %634 = vmatpush.bf16.msra.mxu0 0
        %635 = vmatpush.bf16.msra.mxu0 0
        %636 = vmatpush.bf16.msra.mxu0 0
        %637 = vmatpush.bf16.msra.mxu0 0
        %638 = vmatpush.bf16.msra.mxu0 0
        %639 = vmatpush.bf16.msra.mxu0 %v626
        %640 = vmatpush.bf16.msra.mxu0 %v625
        %641 = vmatmul.bf16.gmra.mxu0 %v631
        %v642 = vpop.f32.mrf.mxu0
        %v643 = vadd.f32 %v615, %v642
        %v644 = vpop.f32.mrf.mxu0
        %645 = vdwg.mxu0
        %v646 = vpack.c.bf16 %v643, %v643
        %s647 = smul.addr %s31, 4
        %s648 = scalar_lea.vmem [#allocation3], %s647
        %v649 = vld [vmem:[%s648] sm:$0xf]
        %s650 = smul.addr %s31, 4
        %s651 = scalar_lea.vmem [#allocation4], %s650
        %v652 = vld [vmem:[%s651] sm:$0xf]
        %vm653 = vcmask 64512
        %v655 = vsel %vm653, %v646, 0
        %v658 = vsel %vm653, %v649, 0
        %660 = vmatpush.bf16.xpose.msra.mxu0 0
        %661 = vmatpush.bf16.xpose.msra.mxu0 0
        %662 = vmatpush.bf16.xpose.msra.mxu0 0
        %663 = vmatpush.bf16.xpose.msra.mxu0 0
        %664 = vmatpush.bf16.xpose.msra.mxu0 0
        %665 = vmatpush.bf16.xpose.msra.mxu0 0
        %666 = vmatpush.bf16.xpose.msra.mxu0 0
        %667 = vmatpush.bf16.xpose.msra.mxu0 %v658
        %668 = vmatmul.bf16.gmra.mxu0 %v655
        %v669 = vpop.f32.mrf.mxu0
        %v670 = vadd.f32 0.0, %v669
        %v671 = vpop.f32.mrf.mxu0
        %672 = vdwg.mxu0
        %v673 = vsel %vm653, %v670, -inf
        %674 = vmax.xlane.f32.xlu0 %v673
        %v675 = vpop.xlane.xlu0 %674
        %v676 = vsub.f32 %v670, %v675
        %v677 = vpack.c.bf16 %v676, %v676
        %v678 = vunpack.c.l.bf16 %v677
        %v679 = vmul.f32 %v678, 1.442695
        %v680 = vpow.pop %v679
        %v681 = vpack.c.bf16 %v680, %v680
        %v682 = vunpack.c.l.bf16 %v681
        %v683 = vsel %vm653, %v682, 0.0
        %684 = vadd.xlane.f32.xlu0 %v683
        %v685 = vpop.xlane.xlu0 %684
        %v687 = vsel %vm653, %v681, 0
        %vm689 = vcmask 1043456
        %v691 = vsel %vm689, %v652, 0
        %693 = vmatpush.bf16.msra.mxu0 0
        %694 = vmatpush.bf16.msra.mxu0 0
        %695 = vmatpush.bf16.msra.mxu0 0
        %696 = vmatpush.bf16.msra.mxu0 0
        %697 = vmatpush.bf16.msra.mxu0 0
        %698 = vmatpush.bf16.msra.mxu0 0
        %699 = vmatpush.bf16.msra.mxu0 0
        %700 = vmatpush.bf16.msra.mxu0 %v691
        %701 = vmatmul.bf16.gmra.mxu0 %v687
        %v702 = vpop.f32.mrf.mxu0
        %v703 = vadd.f32 0.0, %v702
        %v704 = vpop.f32.mrf.mxu0
        %705 = vdwg.mxu0
        %v706 = vrcp.pop %v685
        %v707 = vmul.f32 %v703, %v706
        %v708 = vpack.c.bf16 %v707, %v707
        %v709 = vld [vmem:[%s522] sm:$0xf]
        %v711 = vsel %vm653, %v708, 0
        %v714 = vsel %vm689, %v709, 0
        %716 = vmatpush.bf16.msra.mxu0 0
        %717 = vmatpush.bf16.msra.mxu0 0
        %718 = vmatpush.bf16.msra.mxu0 0
        %719 = vmatpush.bf16.msra.mxu0 0
        %720 = vmatpush.bf16.msra.mxu0 0
        %721 = vmatpush.bf16.msra.mxu0 0
        %722 = vmatpush.bf16.msra.mxu0 0
        %723 = vmatpush.bf16.msra.mxu0 %v714
        %724 = vmatmul.bf16.gmra.mxu0 %v711
        %v725 = vpop.f32.mrf.mxu0
        %v726 = vadd.f32 0.0, %v725
        %v727 = vpop.f32.mrf.mxu0
        %728 = vdwg.mxu0
        %p729 = scmp.eq.s32.totalorder %s31, 0
        // Predicated region
        $region65: #{tpu_custom_call.1} parent=59 // pred_check
          %p730 = pneg %p729
        $region66: #{tpu_custom_call.1} parent=59 // pred_check_branch
          %732 = sbr.rel (%p730) target = $region68
        $region67: #{tpu_custom_call.1} parent=59 // pred_region
          %733 = vst.msk [vmem:[#allocation2] sm:$0xff] %vm629, 0.0
        $region68: #{tpu_custom_call.1} parent=59 // pred_fallthru
          _
        %v734 = vld [vmem:[#allocation2] sm:$0xff]
        %v735 = vadd.f32 %v734, %v726
        %736 = vst.msk [vmem:[#allocation2] sm:$0xff] %vm629, %v735
        %p737 = scmp.eq.s32.totalorder %s31, 3
        // Predicated region
        $region69: #{tpu_custom_call.1} parent=59 // pred_check
          %p738 = pneg %p737
        $region70: #{tpu_custom_call.1} parent=59 // pred_check_branch
          %740 = sbr.rel (%p738) target = $region72
        $region71: #{tpu_custom_call.1} parent=59 // pred_region
          %v741 = vld [vmem:[#allocation2] sm:$0xff]
          %v742 = vld [vmem:[%s9] sm:$0x1]
          %v744 = vperm.slane %v742, 0
          %v746 = vadd.f32 %v741, %v744
          %747 = vst.msk [vmem:[%s483] sm:$0xff] %vm629, %v746
        $region72: #{tpu_custom_call.1} parent=59 // pred_fallthru
          _
        %s748 = sand.u32 %s310, 1
        %s749 = scalar_lea.sflag [#allocation6], %s748
        %s750 = sand.u32 %s310, 1
        %s751 = smul.addr %s750, 8
        %s752 = scalar_lea.vmem [#allocation5], %s751
        // Predicated region
        $region73: #{tpu_custom_call.1} parent=59 // pred_check
          %p753 = pneg %p320
        $region74: #{tpu_custom_call.1} parent=59 // pred_check_branch
          %755 = sbr.rel (%p753) target = $region76
        $region75: #{tpu_custom_call.1} parent=59 // pred_region
          %757 = vsyncadd %s749, 0
          %s758 = sadd.s32 %s30, %s29
          %s759 = smul.addr %s758, 8
          %s760 = scalar_lea.hbm %s10, %s759
          %s762 = sshll.u32 %s752, 4
          %s763 = int_to_ptr.vmem [resolvable:$true] %s762
          %s764 = sshll.u32 %s760, 4
          %s765 = int_to_ptr.hbm [resolvable:$true] %s764
          %767 = dma.vmem_to_hbm [thread:$0]  %s763, 128, %s765, %s749
        $region76: #{tpu_custom_call.1} parent=59 // pred_fallthru
          _
      $region60: #{tpu_custom_call.1} parent=5 // pred_fallthru
        _
      %p768 = scmp.le.s32.totalorder 2, %s19
      // Predicated region
      $region77: #{tpu_custom_call.1} parent=5 // pred_check
        %p769 = pneg %p768
      $region78: #{tpu_custom_call.1} parent=5 // pred_check_branch
        %771 = sbr.rel (%p769) target = $region80
      $region79: #{tpu_custom_call.1} parent=5 // pred_region
        %s772 = ssub.s32 %s19, 2
        // Predicated region
        $region81: #{tpu_custom_call.1} parent=79 // pred_check
          %p773 = pneg %p326
        $region82: #{tpu_custom_call.1} parent=79 // pred_check_branch
          %775 = sbr.rel (%p773) target = $region84
        $region83: #{tpu_custom_call.1} parent=79 // pred_region
          %s776 = sand.u32 %s311, 1
          %s777 = scalar_lea.sflag [#allocation6], %s776
          %s778 = sand.u32 %s311, 1
          %s779 = smul.addr %s778, 8
          %s780 = scalar_lea.vmem [#allocation5], %s779
          %782 = dma.done %s777, 128
        $region84: #{tpu_custom_call.1} parent=79 // pred_fallthru
          _
      $region80: #{tpu_custom_call.1} parent=5 // pred_fallthru
        _
    $region6: #{tpu_custom_call.1} parent=1 // loop_footer
      %s23 = sadd.s32 1, %s19
    $region7: #{tpu_custom_call.1} parent=1 // loop_footer_branch
      %18 = sbr.rel target = $region3
    $region8: #{tpu_custom_call.1} parent=1 // loop_exit
      _
    %783 = vsyncpa [#allocation6], 1
    %s784 = scalar_lea.sflag [#allocation6], 1
    %785 = vsyncpa %s784, 1

// kernel: tpu_custom_call.1
$region0: #{tpu_custom_call.1}
  #allocation0 [shape = 'u32[]', space=smem, size = 0x4, offset = 0x4, fixed_abs, tag = 'smem constant byte address 0x4 - core index']
  #allocation1 [shape = 'u32[72,128]{1,0:T(1,128)}', space=vmem, size = 0x9000, scoped, tag = 'internal scratch']
  #allocation2 [shape = 'f32[8,32]{1,0:T(8,128)}', space=vmem, size = 0x1000, scoped, tag = 'scratch operand']
  #allocation3 [shape = 'bf16[4,8,8]{2,1,0:T(8,128)(2,1)}', space=vmem, size = 0x2000, scoped, tag = 'scratch operand']
  #allocation4 [shape = 'bf16[4,8,8]{2,1,0:T(8,128)(2,1)}', space=vmem, size = 0x2000, scoped, tag = 'scratch operand']
  %s0 = inlined_call_operand.vmem [shape: bf16[2,8,32], index: 0, kind: input, shape index: {}]
  %s1 = inlined_call_operand.vmem [shape: bf16[2,8,32], index: 1, kind: input, shape index: {}]
  %s2 = inlined_call_operand.vmem [shape: bf16[4,32,8], index: 2, kind: input, shape index: {}]
  %s3 = inlined_call_operand.vmem [shape: f32[4,1,8], index: 3, kind: input, shape index: {}]
  %s4 = inlined_call_operand.vmem [shape: bf16[4,32,8], index: 4, kind: input, shape index: {}]
  %s5 = inlined_call_operand.vmem [shape: f32[4,1,8], index: 5, kind: input, shape index: {}]
  %s6 = inlined_call_operand.vmem [shape: bf16[4,32,8], index: 6, kind: input, shape index: {}]
  %s7 = inlined_call_operand.vmem [shape: f32[4,1,8], index: 7, kind: input, shape index: {}]
  %s8 = inlined_call_operand.vmem [shape: bf16[4,8,32], index: 8, kind: input, shape index: {}]
  %s9 = inlined_call_operand.vmem [shape: f32[1,32], index: 9, kind: input, shape index: {}]
  %s10 = inlined_call_operand.hbm [shape: f32[2,8,32], index: 10, kind: output, shape index: {}]
  %s11 = sld [smem:[#allocation0]]
  $region85: #{tpu_custom_call.1} parent=0
    _
  %s13 = ssub.s32 1, %s11
  %s14 = scalar_select 0, %s13, %s11
  $region1: #{tpu_custom_call.1} parent=0
    #allocation5 [shape = 'u8[8192]{0}', space=vmem, size = 0x2000, scoped, tag = 'output window, operand 0']
    #allocation6 [shape = 's32[2]{0}', space=sflag, size = 0x8, scoped, tag = 'scoped memory for tpu_custom_call.1']
    %15 = vsyncpa [#allocation6], 0
    %s16 = scalar_lea.sflag [#allocation6], 1
    %17 = vsyncpa %s16, 0
    loop: start=0, step=1, limit=10
    $region2: #{tpu_custom_call.1} parent=1 // loop_pre_header
      _
    $region3: #{tpu_custom_call.1} parent=1 // loop_header
      %s19 = sphi 0, %s23
      %p20 = scmp.ge.s32.totalorder %s19, 10
      %s26 = sphi 0, %s45
      %s27 = sphi 0, %s41
      %s28 = sphi 0, %s37
      %s29 = sphi 0, %s26
      %s30 = sphi 0, %s27
      %s31 = sphi 0, %s28
      %s32 = sphi 0, %s29
      %s33 = sphi 0, %s30
      %s34 = sphi 0, %s31
      %s50 = sphi 0, %s52
      %s53 = sphi 0, %s50
      %s54 = sphi 0, %s53
      %s70 = sphi 0, %s54
      %s76 = sphi 0, %s78
      %s79 = sphi 0, %s76
      %s80 = sphi 0, %s79
      %s96 = sphi 0, %s80
      %s102 = sphi 0, %s104
      %s105 = sphi 0, %s102
      %s106 = sphi 0, %s105
      %s122 = sphi 0, %s106
      %s128 = sphi 0, %s130
      %s131 = sphi 0, %s128
      %s132 = sphi 0, %s131
      %s148 = sphi 0, %s132
      %s154 = sphi 0, %s156
      %s157 = sphi 0, %s154
      %s158 = sphi 0, %s157
      %s174 = sphi 0, %s158
      %s180 = sphi 0, %s182
      %s183 = sphi 0, %s180
      %s184 = sphi 0, %s183
      %s200 = sphi 0, %s184
      %s206 = sphi 0, %s208
      %s209 = sphi 0, %s206
      %s210 = sphi 0, %s209
      %s226 = sphi 0, %s210
      %s232 = sphi 0, %s234
      %s235 = sphi 0, %s232
      %s236 = sphi 0, %s235
      %s252 = sphi 0, %s236
      %s258 = sphi 0, %s260
      %s261 = sphi 0, %s258
      %s262 = sphi 0, %s261
      %s278 = sphi 0, %s262
      %s282 = sphi 0, %s282
      %s284 = sphi 0, %s282
      %s285 = sphi 0, %s284
      %s299 = sphi 0, %s285
      %s307 = sphi 0, %s309
      %s310 = sphi 0, %s307
      %s311 = sphi 0, %s310
      %s327 = sphi 0, %s311
    $region4: #{tpu_custom_call.1} parent=1 // loop_header_branch
      %22 = sbr.rel (%p20) target = $region8
    $region5: #{tpu_custom_call.1} parent=1 // loop_body
      %s24 = ssub.s32 %s19, 1
      %s25 = ssub.s32 %s19, 2
      %s35 = sadd.s32 1, %s28
      %p36 = scmp.ge.s32.totalorder %s35, 4
      %s37 = scalar_select %p36, 0, %s35
      %s38 = sadd.s32 1, %s27
      %s39 = scalar_select %p36, %s38, %s27
      %p40 = scmp.ge.s32.totalorder %s39, 1
      %s41 = scalar_select %p40, 0, %s39
      %s42 = sadd.s32 1, %s26
      %s43 = scalar_select %p40, %s42, %s26
      %p44 = scmp.ge.s32.totalorder %s43, 2
      %s45 = scalar_select %p44, 0, %s43
      %s46 = ssub.s32 %s26, %s45
      %s47 = ssub.s32 %s27, %s41
      %s48 = sor.u32 %s46, %s47
      %p49 = scmp.eq.s32.totalorder %s48, 0
      %s51 = sadd.s32 %s50, 1
      %s52 = scalar_select %p49, %s50, %s51
      %p55 = pneg %p49
      %p56 = scmp.eq.s32.totalorder %s19, 7
      %p57 = por %p55, %p56
      %p58 = scmp.ne.s32.totalorder %s50, %s53
      %p59 = scmp.eq.s32.totalorder %s19, 0
      %p60 = por %p58, %p59
      %p61 = scmp.ne.s32.totalorder %s50, %s53
      %p62 = scmp.eq.s32.totalorder %s24, 7
      %p63 = por %p61, %p62
      %p64 = scmp.ne.s32.totalorder %s53, %s54
      %p65 = scmp.eq.s32.totalorder %s24, 0
      %p66 = por %p64, %p65
      %p67 = scmp.ne.s32.totalorder %s53, %s54
      %p68 = scmp.eq.s32.totalorder %s25, 7
      %p69 = por %p67, %p68
      %p71 = scmp.ne.s32.totalorder %s54, %s70
      %p72 = scmp.eq.s32.totalorder %s25, 0
      %p73 = por %p71, %p72
      %s74 = ssub.s32 %s26, %s45
      %p75 = scmp.eq.s32.totalorder %s74, 0
      %s77 = sadd.s32 %s76, 1
      %s78 = scalar_select %p75, %s76, %s77
      %p81 = pneg %p75
      %p82 = scmp.eq.s32.totalorder %s19, 7
      %p83 = por %p81, %p82
      %p84 = scmp.ne.s32.totalorder %s76, %s79
      %p85 = scmp.eq.s32.totalorder %s19, 0
      %p86 = por %p84, %p85
      %p87 = scmp.ne.s32.totalorder %s76, %s79
      %p88 = scmp.eq.s32.totalorder %s24, 7
      %p89 = por %p87, %p88
      %p90 = scmp.ne.s32.totalorder %s79, %s80
      %p91 = scmp.eq.s32.totalorder %s24, 0
      %p92 = por %p90, %p91
      %p93 = scmp.ne.s32.totalorder %s79, %s80
      %p94 = scmp.eq.s32.totalorder %s25, 7
      %p95 = por %p93, %p94
      %p97 = scmp.ne.s32.totalorder %s80, %s96
      %p98 = scmp.eq.s32.totalorder %s25, 0
      %p99 = por %p97, %p98
      %s100 = ssub.s32 %s28, %s37
      %p101 = scmp.eq.s32.totalorder %s100, 0
      %s103 = sadd.s32 %s102, 1
      %s104 = scalar_select %p101, %s102, %s103
      %p107 = pneg %p101
      %p108 = scmp.eq.s32.totalorder %s19, 7
      %p109 = por %p107, %p108
      %p110 = scmp.ne.s32.totalorder %s102, %s105
      %p111 = scmp.eq.s32.totalorder %s19, 0
      %p112 = por %p110, %p111
      %p113 = scmp.ne.s32.totalorder %s102, %s105
      %p114 = scmp.eq.s32.totalorder %s24, 7
      %p115 = por %p113, %p114
      %p116 = scmp.ne.s32.totalorder %s105, %s106
      %p117 = scmp.eq.s32.totalorder %s24, 0
      %p118 = por %p116, %p117
      %p119 = scmp.ne.s32.totalorder %s105, %s106
      %p120 = scmp.eq.s32.totalorder %s25, 7
      %p121 = por %p119, %p120
      %p123 = scmp.ne.s32.totalorder %s106, %s122
      %p124 = scmp.eq.s32.totalorder %s25, 0
      %p125 = por %p123, %p124
      %s126 = ssub.s32 %s28, %s37
      %p127 = scmp.eq.s32.totalorder %s126, 0
      %s129 = sadd.s32 %s128, 1
      %s130 = scalar_select %p127, %s128, %s129
      %p133 = pneg %p127
      %p134 = scmp.eq.s32.totalorder %s19, 7
      %p135 = por %p133, %p134
      %p136 = scmp.ne.s32.totalorder %s128, %s131
      %p137 = scmp.eq.s32.totalorder %s19, 0
      %p138 = por %p136, %p137
      %p139 = scmp.ne.s32.totalorder %s128, %s131
      %p140 = scmp.eq.s32.totalorder %s24, 7
      %p141 = por %p139, %p140
      %p142 = scmp.ne.s32.totalorder %s131, %s132
      %p143 = scmp.eq.s32.totalorder %s24, 0
      %p144 = por %p142, %p143
      %p145 = scmp.ne.s32.totalorder %s131, %s132
      %p146 = scmp.eq.s32.totalorder %s25, 7
      %p147 = por %p145, %p146
      %p149 = scmp.ne.s32.totalorder %s132, %s148
      %p150 = scmp.eq.s32.totalorder %s25, 0
      %p151 = por %p149, %p150
      %s152 = ssub.s32 %s28, %s37
      %p153 = scmp.eq.s32.totalorder %s152, 0
      %s155 = sadd.s32 %s154, 1
      %s156 = scalar_select %p153, %s154, %s155
      %p159 = pneg %p153
      %p160 = scmp.eq.s32.totalorder %s19, 7
      %p161 = por %p159, %p160
      %p162 = scmp.ne.s32.totalorder %s154, %s157
      %p163 = scmp.eq.s32.totalorder %s19, 0
      %p164 = por %p162, %p163
      %p165 = scmp.ne.s32.totalorder %s154, %s157
      %p166 = scmp.eq.s32.totalorder %s24, 7
      %p167 = por %p165, %p166
      %p168 = scmp.ne.s32.totalorder %s157, %s158
      %p169 = scmp.eq.s32.totalorder %s24, 0
      %p170 = por %p168, %p169
      %p171 = scmp.ne.s32.totalorder %s157, %s158
      %p172 = scmp.eq.s32.totalorder %s25, 7
      %p173 = por %p171, %p172
      %p175 = scmp.ne.s32.totalorder %s158, %s174
      %p176 = scmp.eq.s32.totalorder %s25, 0
      %p177 = por %p175, %p176
      %s178 = ssub.s32 %s28, %s37
      %p179 = scmp.eq.s32.totalorder %s178, 0
      %s181 = sadd.s32 %s180, 1
      %s182 = scalar_select %p179, %s180, %s181
      %p185 = pneg %p179
      %p186 = scmp.eq.s32.totalorder %s19, 7
      %p187 = por %p185, %p186
      %p188 = scmp.ne.s32.totalorder %s180, %s183
      %p189 = scmp.eq.s32.totalorder %s19, 0
      %p190 = por %p188, %p189
      %p191 = scmp.ne.s32.totalorder %s180, %s183
      %p192 = scmp.eq.s32.totalorder %s24, 7
      %p193 = por %p191, %p192
      %p194 = scmp.ne.s32.totalorder %s183, %s184
      %p195 = scmp.eq.s32.totalorder %s24, 0
      %p196 = por %p194, %p195
      %p197 = scmp.ne.s32.totalorder %s183, %s184
      %p198 = scmp.eq.s32.totalorder %s25, 7
      %p199 = por %p197, %p198
      %p201 = scmp.ne.s32.totalorder %s184, %s200
      %p202 = scmp.eq.s32.totalorder %s25, 0
      %p203 = por %p201, %p202
      %s204 = ssub.s32 %s28, %s37
      %p205 = scmp.eq.s32.totalorder %s204, 0
      %s207 = sadd.s32 %s206, 1
      %s208 = scalar_select %p205, %s206, %s207
      %p211 = pneg %p205
      %p212 = scmp.eq.s32.totalorder %s19, 7
      %p213 = por %p211, %p212
      %p214 = scmp.ne.s32.totalorder %s206, %s209
      %p215 = scmp.eq.s32.totalorder %s19, 0
      %p216 = por %p214, %p215
      %p217 = scmp.ne.s32.totalorder %s206, %s209
      %p218 = scmp.eq.s32.totalorder %s24, 7
      %p219 = por %p217, %p218
      %p220 = scmp.ne.s32.totalorder %s209, %s210
      %p221 = scmp.eq.s32.totalorder %s24, 0
      %p222 = por %p220, %p221
      %p223 = scmp.ne.s32.totalorder %s209, %s210
      %p224 = scmp.eq.s32.totalorder %s25, 7
      %p225 = por %p223, %p224
      %p227 = scmp.ne.s32.totalorder %s210, %s226
      %p228 = scmp.eq.s32.totalorder %s25, 0
      %p229 = por %p227, %p228
      %s230 = ssub.s32 %s28, %s37
      %p231 = scmp.eq.s32.totalorder %s230, 0
      %s233 = sadd.s32 %s232, 1
      %s234 = scalar_select %p231, %s232, %s233
      %p237 = pneg %p231
      %p238 = scmp.eq.s32.totalorder %s19, 7
      %p239 = por %p237, %p238
      %p240 = scmp.ne.s32.totalorder %s232, %s235
      %p241 = scmp.eq.s32.totalorder %s19, 0
      %p242 = por %p240, %p241
      %p243 = scmp.ne.s32.totalorder %s232, %s235
      %p244 = scmp.eq.s32.totalorder %s24, 7
      %p245 = por %p243, %p244
      %p246 = scmp.ne.s32.totalorder %s235, %s236
      %p247 = scmp.eq.s32.totalorder %s24, 0
      %p248 = por %p246, %p247
      %p249 = scmp.ne.s32.totalorder %s235, %s236
      %p250 = scmp.eq.s32.totalorder %s25, 7
      %p251 = por %p249, %p250
      %p253 = scmp.ne.s32.totalorder %s236, %s252
      %p254 = scmp.eq.s32.totalorder %s25, 0
      %p255 = por %p253, %p254
      %s256 = ssub.s32 %s28, %s37
      %p257 = scmp.eq.s32.totalorder %s256, 0
      %s259 = sadd.s32 %s258, 1
      %s260 = scalar_select %p257, %s258, %s259
      %p263 = pneg %p257
      %p264 = scmp.eq.s32.totalorder %s19, 7
      %p265 = por %p263, %p264
      %p266 = scmp.ne.s32.totalorder %s258, %s261
      %p267 = scmp.eq.s32.totalorder %s19, 0
      %p268 = por %p266, %p267
      %p269 = scmp.ne.s32.totalorder %s258, %s261
      %p270 = scmp.eq.s32.totalorder %s24, 7
      %p271 = por %p269, %p270
      %p272 = scmp.ne.s32.totalorder %s261, %s262
      %p273 = scmp.eq.s32.totalorder %s24, 0
      %p274 = por %p272, %p273
      %p275 = scmp.ne.s32.totalorder %s261, %s262
      %p276 = scmp.eq.s32.totalorder %s25, 7
      %p277 = por %p275, %p276
      %p279 = scmp.ne.s32.totalorder %s262, %s278
      %p280 = scmp.eq.s32.totalorder %s25, 0
      %p281 = por %p279, %p280
      %s283 = sadd.s32 %s282, 1
      %p286 = scmp.eq.s32.totalorder %s19, 7
      %p287 = scmp.ne.s32.totalorder %s282, %s284
      %p288 = scmp.eq.s32.totalorder %s19, 0
      %p289 = por %p287, %p288
      %p290 = scmp.ne.s32.totalorder %s282, %s284
      %p291 = scmp.eq.s32.totalorder %s24, 7
      %p292 = por %p290, %p291
      %p293 = scmp.ne.s32.totalorder %s284, %s285
      %p294 = scmp.eq.s32.totalorder %s24, 0
      %p295 = por %p293, %p294
      %p296 = scmp.ne.s32.totalorder %s284, %s285
      %p297 = scmp.eq.s32.totalorder %s25, 7
      %p298 = por %p296, %p297
      %p300 = scmp.ne.s32.totalorder %s285, %s299
      %p301 = scmp.eq.s32.totalorder %s25, 0
      %p302 = por %p300, %p301
      %s303 = ssub.s32 %s26, %s45
      %s304 = ssub.s32 %s27, %s41
      %s305 = sor.u32 %s303, %s304
      %p306 = scmp.eq.s32.totalorder %s305, 0
      %s308 = sadd.s32 %s307, 1
      %s309 = scalar_select %p306, %s307, %s308
      %p312 = pneg %p306
      %p313 = scmp.eq.s32.totalorder %s19, 7
      %p314 = por %p312, %p313
      %p315 = scmp.ne.s32.totalorder %s307, %s310
      %p316 = scmp.eq.s32.totalorder %s19, 0
      %p317 = por %p315, %p316
      %p318 = scmp.ne.s32.totalorder %s307, %s310
      %p319 = scmp.eq.s32.totalorder %s24, 7
      %p320 = por %p318, %p319
      %p321 = scmp.ne.s32.totalorder %s310, %s311
      %p322 = scmp.eq.s32.totalorder %s24, 0
      %p323 = por %p321, %p322
      %p324 = scmp.ne.s32.totalorder %s310, %s311
      %p325 = scmp.eq.s32.totalorder %s25, 7
      %p326 = por %p324, %p325
      %p328 = scmp.ne.s32.totalorder %s311, %s327
      %p329 = scmp.eq.s32.totalorder %s25, 0
      %p330 = por %p328, %p329
      %p331 = scmp.le.s32.totalorder 1, %s19
      %p332 = scmp.lt.s32.totalorder %s19, 9
      %p333 = pnand %p331, %p332
      %p334 = pneg %p333
      // Predicated region
      $region9: #{tpu_custom_call.1} parent=5 // pred_check
        _
      $region10: #{tpu_custom_call.1} parent=5 // pred_check_branch
        %336 = sbr.rel (%p333) target = $region12
      $region11: #{tpu_custom_call.1} parent=5 // pred_region
        %s337 = ssub.s32 %s19, 1
        // Predicated region
        $region13: #{tpu_custom_call.1} parent=11 // pred_check
          %p338 = pneg %p295
        $region14: #{tpu_custom_call.1} parent=11 // pred_check_branch
          %340 = sbr.rel (%p338) target = $region16
        $region15: #{tpu_custom_call.1} parent=11 // pred_region
          _
        $region16: #{tpu_custom_call.1} parent=11 // pred_fallthru
          _
      $region12: #{tpu_custom_call.1} parent=5 // pred_fallthru
        _
      %p341 = scmp.lt.s32.totalorder %s19, 8
      // Predicated region
      $region17: #{tpu_custom_call.1} parent=5 // pred_check
        %p342 = pneg %p341
      $region18: #{tpu_custom_call.1} parent=5 // pred_check_branch
        %344 = sbr.rel (%p342) target = $region20
      $region19: #{tpu_custom_call.1} parent=5 // pred_region
        // Predicated region
        $region21: #{tpu_custom_call.1} parent=19 // pred_check
          %p345 = pneg %p60
        $region22: #{tpu_custom_call.1} parent=19 // pred_check_branch
          %347 = sbr.rel (%p345) target = $region24
        $region23: #{tpu_custom_call.1} parent=19 // pred_region
          %p348 = scmp.lt.s32.totalorder %s26, 1
          %s349 = scalar_select %p348, %s26, 1
          %p350 = scmp.lt.s32.totalorder %s27, 0
          %s351 = scalar_select %p350, %s27, 0
          %s352 = sadd.s32 %s351, %s349
          %s353 = smul.addr %s352, 4
          %s354 = scalar_lea.vmem %s0, %s353
        $region24: #{tpu_custom_call.1} parent=19 // pred_fallthru
          _
        // Predicated region
        $region25: #{tpu_custom_call.1} parent=19 // pred_check
          %p355 = pneg %p86
        $region26: #{tpu_custom_call.1} parent=19 // pred_check_branch
          %357 = sbr.rel (%p355) target = $region28
        $region27: #{tpu_custom_call.1} parent=19 // pred_region
          %p358 = scmp.lt.s32.totalorder %s26, 1
          %s359 = scalar_select %p358, %s26, 1
          %s360 = smul.addr %s359, 4
          %s361 = scalar_lea.vmem %s1, %s360
        $region28: #{tpu_custom_call.1} parent=19 // pred_fallthru
          _
        // Predicated region
        $region29: #{tpu_custom_call.1} parent=19 // pred_check
          %p362 = pneg %p112
        $region30: #{tpu_custom_call.1} parent=19 // pred_check_branch
          %364 = sbr.rel (%p362) target = $region32
        $region31: #{tpu_custom_call.1} parent=19 // pred_region
          %p365 = scmp.lt.s32.totalorder %s28, 3
          %s366 = scalar_select %p365, %s28, 3
          %s367 = smul.addr %s366, 4
          %s368 = smul.addr %s367, 4
          %s369 = scalar_lea.vmem %s2, %s368
        $region32: #{tpu_custom_call.1} parent=19 // pred_fallthru
          _
        // Predicated region
        $region33: #{tpu_custom_call.1} parent=19 // pred_check
          %p370 = pneg %p138
        $region34: #{tpu_custom_call.1} parent=19 // pred_check_branch
          %372 = sbr.rel (%p370) target = $region36
        $region35: #{tpu_custom_call.1} parent=19 // pred_region
          %p373 = scmp.lt.s32.totalorder %s28, 3
          %s374 = scalar_select %p373, %s28, 3
          %s375 = scalar_lea.vmem %s3, %s374
        $region36: #{tpu_custom_call.1} parent=19 // pred_fallthru
          _
        // Predicated region
        $region37: #{tpu_custom_call.1} parent=19 // pred_check
          %p376 = pneg %p164
        $region38: #{tpu_custom_call.1} parent=19 // pred_check_branch
          %378 = sbr.rel (%p376) target = $region40
        $region39: #{tpu_custom_call.1} parent=19 // pred_region
          %p379 = scmp.lt.s32.totalorder %s28, 3
          %s380 = scalar_select %p379, %s28, 3
          %s381 = smul.addr %s380, 4
          %s382 = smul.addr %s381, 4
          %s383 = scalar_lea.vmem %s4, %s382
        $region40: #{tpu_custom_call.1} parent=19 // pred_fallthru
          _
        // Predicated region
        $region41: #{tpu_custom_call.1} parent=19 // pred_check
          %p384 = pneg %p190
        $region42: #{tpu_custom_call.1} parent=19 // pred_check_branch
          %386 = sbr.rel (%p384) target = $region44
        $region43: #{tpu_custom_call.1} parent=19 // pred_region
          %p387 = scmp.lt.s32.totalorder %s28, 3
          %s388 = scalar_select %p387, %s28, 3
          %s389 = scalar_lea.vmem %s5, %s388
        $region44: #{tpu_custom_call.1} parent=19 // pred_fallthru
          _
        // Predicated region
        $region45: #{tpu_custom_call.1} parent=19 // pred_check
          %p390 = pneg %p216
        $region46: #{tpu_custom_call.1} parent=19 // pred_check_branch
          %392 = sbr.rel (%p390) target = $region48
        $region47: #{tpu_custom_call.1} parent=19 // pred_region
          %p393 = scmp.lt.s32.totalorder %s28, 3
          %s394 = scalar_select %p393, %s28, 3
          %s395 = smul.addr %s394, 4
          %s396 = smul.addr %s395, 4
          %s397 = scalar_lea.vmem %s6, %s396
        $region48: #{tpu_custom_call.1} parent=19 // pred_fallthru
          _
        // Predicated region
        $region49: #{tpu_custom_call.1} parent=19 // pred_check
          %p398 = pneg %p242
        $region50: #{tpu_custom_call.1} parent=19 // pred_check_branch
          %400 = sbr.rel (%p398) target = $region52
        $region51: #{tpu_custom_call.1} parent=19 // pred_region
          %p401 = scmp.lt.s32.totalorder %s28, 3
          %s402 = scalar_select %p401, %s28, 3
          %s403 = scalar_lea.vmem %s7, %s402
        $region52: #{tpu_custom_call.1} parent=19 // pred_fallthru
          _
        // Predicated region
        $region53: #{tpu_custom_call.1} parent=19 // pred_check
          %p404 = pneg %p268
        $region54: #{tpu_custom_call.1} parent=19 // pred_check_branch
          %406 = sbr.rel (%p404) target = $region56
        $region55: #{tpu_custom_call.1} parent=19 // pred_region
          %p407 = scmp.lt.s32.totalorder %s28, 3
          %s408 = scalar_select %p407, %s28, 3
          %s409 = smul.addr %s408, 4
          %s410 = scalar_lea.vmem %s8, %s409
        $region56: #{tpu_custom_call.1} parent=19 // pred_fallthru
          _
      $region20: #{tpu_custom_call.1} parent=5 // pred_fallthru
        _
      %p411 = scmp.le.s32.totalorder 1, %s19
      %p412 = scmp.lt.s32.totalorder %s19, 9
      %p413 = pnand %p411, %p412
      %p414 = pneg %p413
      // Predicated region
      $region57: #{tpu_custom_call.1} parent=5 // pred_check
        _
      $region58: #{tpu_custom_call.1} parent=5 // pred_check_branch
        %416 = sbr.rel (%p413) target = $region60
      $region59: #{tpu_custom_call.1} parent=5 // pred_region
        %s417 = ssub.s32 %s19, 1
        %p418 = scmp.lt.s32.totalorder %s29, 1
        %s419 = scalar_select %p418, %s29, 1
        %p420 = scmp.lt.s32.totalorder %s30, 0
        %s421 = scalar_select %p420, %s30, 0
        %s422 = sadd.s32 %s421, %s419
        %s423 = smul.addr %s422, 4
        %s424 = scalar_lea.vmem %s0, %s423
        %p425 = pneg %p66
        %p426 = pneg %p63
        %p427 = scmp.lt.s32.totalorder %s29, 1
        %s428 = scalar_select %p427, %s29, 1
        %s429 = smul.addr %s428, 4
        %s430 = scalar_lea.vmem %s1, %s429
        %p431 = pneg %p92
        %p432 = pneg %p89
        %p433 = scmp.lt.s32.totalorder %s31, 3
        %s434 = scalar_select %p433, %s31, 3
        %s435 = smul.addr %s434, 4
        %s436 = smul.addr %s435, 4
        %s437 = scalar_lea.vmem %s2, %s436
        %p438 = pneg %p118
        %p439 = pneg %p115
        %p440 = scmp.lt.s32.totalorder %s31, 3
        %s441 = scalar_select %p440, %s31, 3
        %s442 = scalar_lea.vmem %s3, %s441
        %p443 = pneg %p144
        %p444 = pneg %p141
        %p445 = scmp.lt.s32.totalorder %s31, 3
        %s446 = scalar_select %p445, %s31, 3
        %s447 = smul.addr %s446, 4
        %s448 = smul.addr %s447, 4
        %s449 = scalar_lea.vmem %s4, %s448
        %p450 = pneg %p170
        %p451 = pneg %p167
        %p452 = scmp.lt.s32.totalorder %s31, 3
        %s453 = scalar_select %p452, %s31, 3
        %s454 = scalar_lea.vmem %s5, %s453
        %p455 = pneg %p196
        %p456 = pneg %p193
        %p457 = scmp.lt.s32.totalorder %s31, 3
        %s458 = scalar_select %p457, %s31, 3
        %s459 = smul.addr %s458, 4
        %s460 = smul.addr %s459, 4
        %s461 = scalar_lea.vmem %s6, %s460
        %p462 = pneg %p222
        %p463 = pneg %p219
        %p464 = scmp.lt.s32.totalorder %s31, 3
        %s465 = scalar_select %p464, %s31, 3
        %s466 = scalar_lea.vmem %s7, %s465
        %p467 = pneg %p248
        %p468 = pneg %p245
        %p469 = scmp.lt.s32.totalorder %s31, 3
        %s470 = scalar_select %p469, %s31, 3
        %s471 = smul.addr %s470, 4
        %s472 = scalar_lea.vmem %s8, %s471
        %p473 = pneg %p274
        %p474 = pneg %p271
        %p475 = pneg %p295
        %p476 = pneg %p292
        %p477 = pneg %p323
        %p478 = pneg %p320
        %s479 = sand.u32 %s310, 1
        %s480 = scalar_lea.sflag [#allocation6], %s479
        %s481 = sand.u32 %s310, 1
        %s482 = smul.addr %s481, 8
        %s483 = scalar_lea.vmem [#allocation5], %s482
        %p484 = scmp.lt.s32.totalorder %s29, 1
        %s485 = scalar_select %p484, %s29, 1
        %p486 = scmp.lt.s32.totalorder %s30, 0
        %s487 = scalar_select %p486, %s30, 0
        %s488 = sadd.s32 %s487, %s485
        %s489 = smul.addr %s488, 4
        %s490 = scalar_lea.vmem %s0, %s489
        %p491 = scmp.lt.s32.totalorder %s29, 1
        %s492 = scalar_select %p491, %s29, 1
        %s493 = smul.addr %s492, 4
        %s494 = scalar_lea.vmem %s1, %s493
        %p495 = scmp.lt.s32.totalorder %s31, 3
        %s496 = scalar_select %p495, %s31, 3
        %s497 = smul.addr %s496, 4
        %s498 = smul.addr %s497, 4
        %s499 = scalar_lea.vmem %s2, %s498
        %p500 = scmp.lt.s32.totalorder %s31, 3
        %s501 = scalar_select %p500, %s31, 3
        %s502 = scalar_lea.vmem %s3, %s501
        %p503 = scmp.lt.s32.totalorder %s31, 3
        %s504 = scalar_select %p503, %s31, 3
        %s505 = smul.addr %s504, 4
        %s506 = smul.addr %s505, 4
        %s507 = scalar_lea.vmem %s4, %s506
        %p508 = scmp.lt.s32.totalorder %s31, 3
        %s509 = scalar_select %p508, %s31, 3
        %s510 = scalar_lea.vmem %s5, %s509
        %p511 = scmp.lt.s32.totalorder %s31, 3
        %s512 = scalar_select %p511, %s31, 3
        %s513 = smul.addr %s512, 4
        %s514 = smul.addr %s513, 4
        %s515 = scalar_lea.vmem %s6, %s514
        %p516 = scmp.lt.s32.totalorder %s31, 3
        %s517 = scalar_select %p516, %s31, 3
        %s518 = scalar_lea.vmem %s7, %s517
        %p519 = scmp.lt.s32.totalorder %s31, 3
        %s520 = scalar_select %p519, %s31, 3
        %s521 = smul.addr %s520, 4
        %s522 = scalar_lea.vmem %s8, %s521
        %p524 = scmp.eq.s32.totalorder %s30, 0
        // Predicated region
        $region61: #{tpu_custom_call.1} parent=59 // pred_check
          %p525 = pneg %p524
        $region62: #{tpu_custom_call.1} parent=59 // pred_check_branch
          %527 = sbr.rel (%p525) target = $region64
        $region63: #{tpu_custom_call.1} parent=59 // pred_region
          %v528 = vld [vmem:[%s494] sm:$0xf]
          %v529 = vld [vmem:[%s507] sm:$0xf]
          %v530 = vld [vmem:[%s507 + $0x4] sm:$0xf]
          %v531 = vld [vmem:[%s507 + $0x8] sm:$0xf]
          %v532 = vld [vmem:[%s507 + $0xc] sm:$0xf]
          %v533 = vld [vmem:[%s510] sm:$0x1]
          %v535 = vperm.slane %v533, 0
          %v541 = vunpack.c.l.b16 %v529
          %v542 = vunpack.c.l.b16 %v530
          %v543 = vunpack.c.l.b16 %v531
          %v544 = vunpack.c.l.b16 %v532
          %v545 = vpack.c.b16 %v542, %v541
          %v546 = vpack.c.b16 %v544, %v543
          %vm549 = vcmask 261120
          %v551 = vsel %vm549, %v528, 0
          %553 = vmatpush.bf16.msra.mxu0 0
          %554 = vmatpush.bf16.msra.mxu0 0
          %555 = vmatpush.bf16.msra.mxu0 0
          %556 = vmatpush.bf16.msra.mxu0 0
          %557 = vmatpush.bf16.msra.mxu0 0
          %558 = vmatpush.bf16.msra.mxu0 0
          %559 = vmatpush.bf16.msra.mxu0 %v546
          %560 = vmatpush.bf16.msra.mxu0 %v545
          %561 = vmatmul.bf16.gmra.mxu0 %v551
          %v562 = vpop.f32.mrf.mxu0
          %v563 = vadd.f32 %v535, %v562
          %v564 = vpop.f32.mrf.mxu0
          %565 = vdwg.mxu0
          %v566 = vld [vmem:[%s515] sm:$0xf]
          %v567 = vld [vmem:[%s515 + $0x4] sm:$0xf]
          %v568 = vld [vmem:[%s515 + $0x8] sm:$0xf]
          %v569 = vld [vmem:[%s515 + $0xc] sm:$0xf]
          %v570 = vld [vmem:[%s518] sm:$0x1]
          %v572 = vperm.slane %v570, 0
          %v578 = vunpack.c.l.b16 %v566
          %v579 = vunpack.c.l.b16 %v567
          %v580 = vunpack.c.l.b16 %v568
          %v581 = vunpack.c.l.b16 %v569
          %v582 = vpack.c.b16 %v579, %v578
          %v583 = vpack.c.b16 %v581, %v580
          %586 = vmatpush.bf16.msra.mxu0 0
          %587 = vmatpush.bf16.msra.mxu0 0
          %588 = vmatpush.bf16.msra.mxu0 0
          %589 = vmatpush.bf16.msra.mxu0 0
          %590 = vmatpush.bf16.msra.mxu0 0
          %591 = vmatpush.bf16.msra.mxu0 0
          %592 = vmatpush.bf16.msra.mxu0 %v583
          %593 = vmatpush.bf16.msra.mxu0 %v582
          %594 = vmatmul.bf16.gmra.mxu0 %v551
          %v595 = vpop.f32.mrf.mxu0
          %v596 = vadd.f32 %v572, %v595
          %v597 = vpop.f32.mrf.mxu0
          %598 = vdwg.mxu0
          %v599 = vpack.c.bf16 %v563, %v563
          %s600 = smul.addr %s31, 4
          %s601 = scalar_lea.vmem [#allocation3], %s600
          %vm602 = vcmask 60416
          %603 = vst.msk [vmem:[%s601] sm:$0xf] %vm602, %v599
          %v604 = vpack.c.bf16 %v596, %v596
          %s605 = smul.addr %s31, 4
          %s606 = scalar_lea.vmem [#allocation4], %s605
          %607 = vst.msk [vmem:[%s606] sm:$0xf] %vm602, %v604
        $region64: #{tpu_custom_call.1} parent=59 // pred_fallthru
          _
        %v608 = vld [vmem:[%s490] sm:$0xf]
        %v609 = vld [vmem:[%s499] sm:$0xf]
        %v610 = vld [vmem:[%s499 + $0x4] sm:$0xf]
        %v611 = vld [vmem:[%s499 + $0x8] sm:$0xf]
        %v612 = vld [vmem:[%s499 + $0xc] sm:$0xf]
        %v613 = vld [vmem:[%s502] sm:$0x1]
        %v615 = vperm.slane %v613, 0
        %v621 = vunpack.c.l.b16 %v609
        %v622 = vunpack.c.l.b16 %v610
        %v623 = vunpack.c.l.b16 %v611
        %v624 = vunpack.c.l.b16 %v612
        %v625 = vpack.c.b16 %v622, %v621
        %v626 = vpack.c.b16 %v624, %v623
        %vm629 = vcmask 261120
        %v631 = vsel %vm629, %v608, 0
        %633 = vmatpush.bf16.msra.mxu0 0
        %634 = vmatpush.bf16.msra.mxu0 0
        %635 = vmatpush.bf16.msra.mxu0 0
        %636 = vmatpush.bf16.msra.mxu0 0
        %637 = vmatpush.bf16.msra.mxu0 0
        %638 = vmatpush.bf16.msra.mxu0 0
        %639 = vmatpush.bf16.msra.mxu0 %v626
        %640 = vmatpush.bf16.msra.mxu0 %v625
        %641 = vmatmul.bf16.gmra.mxu0 %v631
        %v642 = vpop.f32.mrf.mxu0
        %v643 = vadd.f32 %v615, %v642
        %v644 = vpop.f32.mrf.mxu0
        %645 = vdwg.mxu0
        %v646 = vpack.c.bf16 %v643, %v643
        %s647 = smul.addr %s31, 4
        %s648 = scalar_lea.vmem [#allocation3], %s647
        %v649 = vld [vmem:[%s648] sm:$0xf]
        %s650 = smul.addr %s31, 4
        %s651 = scalar_lea.vmem [#allocation4], %s650
        %v652 = vld [vmem:[%s651] sm:$0xf]
        %vm653 = vcmask 64512
        %v655 = vsel %vm653, %v646, 0
        %v658 = vsel %vm653, %v649, 0
        %660 = vmatpush.bf16.xpose.msra.mxu0 0
        %661 = vmatpush.bf16.xpose.msra.mxu0 0
        %662 = vmatpush.bf16.xpose.msra.mxu0 0
        %663 = vmatpush.bf16.xpose.msra.mxu0 0
        %664 = vmatpush.bf16.xpose.msra.mxu0 0
        %665 = vmatpush.bf16.xpose.msra.mxu0 0
        %666 = vmatpush.bf16.xpose.msra.mxu0 0
        %667 = vmatpush.bf16.xpose.msra.mxu0 %v658
        %668 = vmatmul.bf16.gmra.mxu0 %v655
        %v669 = vpop.f32.mrf.mxu0
        %v670 = vadd.f32 0.0, %v669
        %v671 = vpop.f32.mrf.mxu0
        %672 = vdwg.mxu0
        %v673 = vsel %vm653, %v670, -inf
        %674 = vmax.xlane.f32.xlu0 %v673
        %v675 = vpop.xlane.xlu0 %674
        %v676 = vsub.f32 %v670, %v675
        %v677 = vpack.c.bf16 %v676, %v676
        %v678 = vunpack.c.l.bf16 %v677
        %v679 = vmul.f32 %v678, 1.442695
        %v680 = vpow.pop %v679
        %v681 = vpack.c.bf16 %v680, %v680
        %v682 = vunpack.c.l.bf16 %v681
        %v683 = vsel %vm653, %v682, 0.0
        %684 = vadd.xlane.f32.xlu0 %v683
        %v685 = vpop.xlane.xlu0 %684
        %v687 = vsel %vm653, %v681, 0
        %vm689 = vcmask 1043456
        %v691 = vsel %vm689, %v652, 0
        %693 = vmatpush.bf16.msra.mxu0 0
        %694 = vmatpush.bf16.msra.mxu0 0
        %695 = vmatpush.bf16.msra.mxu0 0
        %696 = vmatpush.bf16.msra.mxu0 0
        %697 = vmatpush.bf16.msra.mxu0 0
        %698 = vmatpush.bf16.msra.mxu0 0
        %699 = vmatpush.bf16.msra.mxu0 0
        %700 = vmatpush.bf16.msra.mxu0 %v691
        %701 = vmatmul.bf16.gmra.mxu0 %v687
        %v702 = vpop.f32.mrf.mxu0
        %v703 = vadd.f32 0.0, %v702
        %v704 = vpop.f32.mrf.mxu0
        %705 = vdwg.mxu0
        %v706 = vrcp.pop %v685
        %v707 = vmul.f32 %v703, %v706
        %v708 = vpack.c.bf16 %v707, %v707
        %v709 = vld [vmem:[%s522] sm:$0xf]
        %v711 = vsel %vm653, %v708, 0
        %v714 = vsel %vm689, %v709, 0
        %716 = vmatpush.bf16.msra.mxu0 0
        %717 = vmatpush.bf16.msra.mxu0 0
        %718 = vmatpush.bf16.msra.mxu0 0
        %719 = vmatpush.bf16.msra.mxu0 0
        %720 = vmatpush.bf16.msra.mxu0 0
        %721 = vmatpush.bf16.msra.mxu0 0
        %722 = vmatpush.bf16.msra.mxu0 0
        %723 = vmatpush.bf16.msra.mxu0 %v714
        %724 = vmatmul.bf16.gmra.mxu0 %v711
        %v725 = vpop.f32.mrf.mxu0
        %v726 = vadd.f32 0.0, %v725
        %v727 = vpop.f32.mrf.mxu0
        %728 = vdwg.mxu0
        %p729 = scmp.eq.s32.totalorder %s31, 0
        // Predicated region
        $region65: #{tpu_custom_call.1} parent=59 // pred_check
          %p730 = pneg %p729
        $region66: #{tpu_custom_call.1} parent=59 // pred_check_branch
          %732 = sbr.rel (%p730) target = $region68
        $region67: #{tpu_custom_call.1} parent=59 // pred_region
          %733 = vst.msk [vmem:[#allocation2] sm:$0xff] %vm629, 0.0
        $region68: #{tpu_custom_call.1} parent=59 // pred_fallthru
          _
        %v734 = vld [vmem:[#allocation2] sm:$0xff]
        %v735 = vadd.f32 %v734, %v726
        %736 = vst.msk [vmem:[#allocation2] sm:$0xff] %vm629, %v735
        %p737 = scmp.eq.s32.totalorder %s31, 3
        // Predicated region
        $region69: #{tpu_custom_call.1} parent=59 // pred_check
          %p738 = pneg %p737
        $region70: #{tpu_custom_call.1} parent=59 // pred_check_branch
          %740 = sbr.rel (%p738) target = $region72
        $region71: #{tpu_custom_call.1} parent=59 // pred_region
          %v741 = vld [vmem:[#allocation2] sm:$0xff]
          %v742 = vld [vmem:[%s9] sm:$0x1]
          %v744 = vperm.slane %v742, 0
          %v746 = vadd.f32 %v741, %v744
          %747 = vst.msk [vmem:[%s483] sm:$0xff] %vm629, %v746
        $region72: #{tpu_custom_call.1} parent=59 // pred_fallthru
          _
        %s748 = sand.u32 %s310, 1
        %s749 = scalar_lea.sflag [#allocation6], %s748
        %s750 = sand.u32 %s310, 1
        %s751 = smul.addr %s750, 8
        %s752 = scalar_lea.vmem [#allocation5], %s751
        // Predicated region
        $region73: #{tpu_custom_call.1} parent=59 // pred_check
          %p753 = pneg %p320
        $region74: #{tpu_custom_call.1} parent=59 // pred_check_branch
          %755 = sbr.rel (%p753) target = $region76
        $region75: #{tpu_custom_call.1} parent=59 // pred_region
          %757 = vsyncadd %s749, 0
          %s758 = sadd.s32 %s30, %s29
          %s759 = smul.addr %s758, 8
          %s760 = scalar_lea.hbm %s10, %s759
          %s762 = sshll.u32 %s752, 4
          %s763 = int_to_ptr.vmem [resolvable:$true] %s762
          %s764 = sshll.u32 %s760, 4
          %s765 = int_to_ptr.hbm [resolvable:$true] %s764
          %767 = dma.vmem_to_hbm [thread:$0]  %s763, 128, %s765, %s749
        $region76: #{tpu_custom_call.1} parent=59 // pred_fallthru
          _
      $region60: #{tpu_custom_call.1} parent=5 // pred_fallthru
        _
      %p768 = scmp.le.s32.totalorder 2, %s19
      // Predicated region
      $region77: #{tpu_custom_call.1} parent=5 // pred_check
        %p769 = pneg %p768
      $region78: #{tpu_custom_call.1} parent=5 // pred_check_branch
        %771 = sbr.rel (%p769) target = $region80
      $region79: #{tpu_custom_call.1} parent=5 // pred_region
        %s772 = ssub.s32 %s19, 2
        // Predicated region
        $region81: #{tpu_custom_call.1} parent=79 // pred_check
          %p773 = pneg %p326
        $region82: #{tpu_custom_call.1} parent=79 // pred_check_branch
          %775 = sbr.rel (%p773) target = $region84
        $region83: #{tpu_custom_call.1} parent=79 // pred_region
          %s776 = sand.u32 %s311, 1
          %s777 = scalar_lea.sflag [#allocation6], %s776
          %s778 = sand.u32 %s311, 1
          %s779 = smul.addr %s778, 8
          %s780 = scalar_lea.vmem [#allocation5], %s779
          %782 = dma.done %s777, 128
        $region84: #{tpu_custom_call.1} parent=79 // pred_fallthru
          _
      $region80: #{tpu_custom_call.1} parent=5 // pred_fallthru
        _
    $region6: #{tpu_custom_call.1} parent=1 // loop_footer
      %s23 = sadd.s32 1, %s19
    $region7: #{tpu_custom_call.1} parent=1 // loop_footer_branch
      %18 = sbr.rel target = $region3
    $region8: #{tpu_custom_call.1} parent=1 // loop_exit
      _
    %783 = vsyncpa [#allocation6], 1
    %s784 = scalar_lea.sflag [#allocation6], 1
    %785 = vsyncpa %s784, 1

</llo_original>
